<compile_context>
chip_gen: v7x
topology: tpu7x:2x2x1
jax: 0.10.0
libtpu: 0.0.40
codegen_flags: <defaults>
</compile_context>

<pallas_src>
import numpy as np
import jax
import jax.numpy as jnp
from jax import lax
from jax.experimental import pallas as pl
from jax.experimental.pallas import tpu as pltpu


_ROW_BLOCK = 8          # sublane-sized row block for the register-blocked accumulator
_NEG_BIG = -1e30        # finite "-inf" for masked max reductions (avoids 0*inf -> NaN)


def _round_up(x, m):
    return ((x + m - 1) // m) * m


def _make_ordreg_kernel(*, N, M, Np, Mp, d_block, kd, nacc):
    """Builds the kernel for fixed (padded) shapes.  Grid = (B 'parallel', kd 'arbitrary')."""
    RB = _ROW_BLOCK
    nrb = Np // RB
    single_chunk = (kd == 1)

    def kernel(zx_ref, zyt_ref, theta_ref, beta_ref, out_ref,
               s_acc, rmax_sc, rsum_sc, cmax_sc, csum_sc):
        # zx_ref:  (1, Np, d_block) f32  z_x chunk (full D when single_chunk)
        # zyt_ref: (1, d_block, Mp) f32  z_y^T chunk (M lane-dense)
        # theta/beta: (1, K) f32 ; out_ref: (1, 1, K) f32
        # s_acc: (Np, Mp) f32 ; r*/c* : softmax stats scratches
        k = pl.program_id(1)

        # ---------------- hot loop: accumulate -L1 over this D chunk ----------------
        @pl.loop(0, nrb)
        def _(rb):
            r0 = pl.multiple_of(rb * RB, RB)
            zx_blk = zx_ref[0, pl.ds(r0, RB), :]                 # (RB, d_block), one load
            # nacc independent partial sums -> independent VALU dependence chains.
            accs = [jnp.zeros((RB, Mp), jnp.float32) for _ in range(nacc)]
            for d in range(d_block):                             # static, bounded unroll
                col = zx_blk[:, d:d + 1]                         # (RB, 1)  static lane slice
                row = zyt_ref[0, pl.ds(d, 1), :]                 # (1, Mp)  static sublane slice
                accs[d % nacc] = accs[d % nacc] + jnp.abs(col - row)
            tot = accs[0]
            for p in range(1, nacc):
                tot = tot + accs[p]
            if single_chunk:
                s_acc[pl.ds(r0, RB), :] = -tot                   # single write, no RMW
            else:
                prev = s_acc[pl.ds(r0, RB), :]
                base = jnp.where(k == 0, jnp.zeros_like(prev), prev)
                s_acc[pl.ds(r0, RB), :] = base - tot

        # ---------------- finalize: streaming soft-symmetric alignment ----------------
        @pl.when(k == kd - 1)
        def _():
            col_valid = lax.broadcasted_iota(jnp.int32, (1, Mp), 1) < M   # (1, Mp)

            cmax_sc[...] = jnp.full((1, Mp), _NEG_BIG, jnp.float32)
            csum_sc[...] = jnp.zeros((1, Mp), jnp.float32)

            # pass 1: masked row / column maxima
            @pl.loop(0, nrb)
            def _(rb):
                r0 = pl.multiple_of(rb * RB, RB)
                blk = s_acc[pl.ds(r0, RB), :]
                rvalid = (r0 + lax.broadcasted_iota(jnp.int32, (RB, 1), 0)) < N
                rmax_sc[pl.ds(r0, RB), :] = jnp.max(
                    jnp.where(col_valid, blk, _NEG_BIG), axis=1, keepdims=True)
                cmax_sc[...] = jnp.maximum(
                    cmax_sc[...],
                    jnp.max(jnp.where(rvalid, blk, _NEG_BIG), axis=0, keepdims=True))

            # pass 2: masked softmax denominators
            @pl.loop(0, nrb)
            def _(rb):
                r0 = pl.multiple_of(rb * RB, RB)
                blk = s_acc[pl.ds(r0, RB), :]
                rvalid = (r0 + lax.broadcasted_iota(jnp.int32, (RB, 1), 0)) < N
                p_row = jnp.where(col_valid,
                                  jnp.exp(blk - rmax_sc[pl.ds(r0, RB), :]), 0.0)
                rsum_sc[pl.ds(r0, RB), :] = jnp.sum(p_row, axis=1, keepdims=True)
                p_col = jnp.where(rvalid, jnp.exp(blk - cmax_sc[...]), 0.0)
                csum_sc[...] = csum_sc[...] + jnp.sum(p_col, axis=0, keepdims=True)

            # exact reciprocals (off the hot path -> no approx, restores f32 accuracy)
            rsum_sc[...] = 1.0 / rsum_sc[...]
            csum_sc[...] = 1.0 / csum_sc[...]

            # pass 3: recompute exp on the fly, accumulate sum(w*s) and sum(w)
            def body(rb, carry):
                ws, wt = carry
                r0 = pl.multiple_of(rb * RB, RB)
                blk = s_acc[pl.ds(r0, RB), :]
                rvalid = (r0 + lax.broadcasted_iota(jnp.int32, (RB, 1), 0)) < N
                a = jnp.where(col_valid,
                              jnp.exp(blk - rmax_sc[pl.ds(r0, RB), :]),
                              0.0) * rsum_sc[pl.ds(r0, RB), :]
                b = jnp.where(rvalid,
                              jnp.exp(blk - cmax_sc[...]), 0.0) * csum_sc[...]
                w = a + b - a * b
                w = jnp.where(rvalid & col_valid, w, 0.0)
                ws = ws + jnp.sum(jnp.sum(w * blk, axis=1, keepdims=True),
                                  axis=0, keepdims=True)
                wt = wt + jnp.sum(jnp.sum(w, axis=1, keepdims=True),
                                  axis=0, keepdims=True)
                return ws, wt

            ws, wt = lax.fori_loop(
                0, nrb, body,
                (jnp.zeros((1, 1), jnp.float32), jnp.zeros((1, 1), jnp.float32)))
            c = ws / wt                                           # exact scalar divide
            out_ref[0] = c * theta_ref[...] + beta_ref[...]

    return kernel


def ordinal_regression_forward_batched(z_x, z_y, theta, beta):
    """z_x: (B, N, D), z_y: (B, M, D), theta: (1, K), beta: (K,) -> (B, K)."""
    B, N, D = z_x.shape
    B2, M, D2 = z_y.shape
    assert B == B2 and D == D2
    K = int(theta.shape[-1])

    RB = _ROW_BLOCK
    Np = _round_up(N, RB)            # sublane-aligned rows
    Mp = _round_up(M, 128)           # lane-dense hot tiles
    if D <= 128:
        Dp = _round_up(D, 8)         # single chunk; z_x fully resident
        d_block = Dp
    else:
        Dp = _round_up(D, 128)       # 128-wide, lane-aligned chunks over D
        d_block = 128
    kd = Dp // d_block
    # Independent partial accumulators in the hot loop; cap total acc vregs ~16.
    nacc = max(1, min(4, 2048 // Mp))

    f32 = jnp.float32
    # Zero padding is exact for L1 (|0 - 0| = 0 along padded D); padded N/M
    # rows/columns are masked out of the softmaxes and the w sums in-kernel.
    zxp = jnp.pad(z_x.astype(f32), ((0, 0), (0, Np - N), (0, Dp - D)))
    zyp = jnp.pad(z_y.astype(f32), ((0, 0), (0, Mp - M), (0, Dp - D)))
    # M lane-dense in the hot (row-block, Mp) tiles: feed z_y transposed (B, Dp, Mp).
    # TODO(synk): this transpose is one extra XLA pass over z_y; fold into the
    # kernel with an XLU transpose only if it shows up in profiles.
    zytp = jnp.transpose(zyp, (0, 2, 1))

    theta2d = theta.reshape(1, K).astype(f32)
    beta2d = beta.reshape(1, K).astype(f32)

    kernel = _make_ordreg_kernel(N=N, M=M, Np=Np, Mp=Mp,
                                 d_block=d_block, kd=kd, nacc=nacc)

    # VMEM budget from the actual working set (double-buffered inputs included).
    vmem_bytes = (
        Np * Mp * 4                      # s_acc scratch
        + 2 * Np * d_block * 4           # z_x chunk (double-buffered)
        + 2 * d_block * Mp * 4           # z_y^T chunk (double-buffered)
        + 2 * Np * 128 * 4               # row max/sum scratches (lane-padded)
        + 2 * 8 * Mp * 4                 # col max/sum scratches (sublane-padded)
    )
    vmem_limit = int(min(max(vmem_bytes + (8 << 20), 32 << 20), 100 << 20))

    out = pl.pallas_call(
        kernel,
        out_shape=jax.ShapeDtypeStruct((B, 1, K), f32),
        grid_spec=pltpu.PrefetchScalarGridSpec(
            num_scalar_prefetch=0,
            grid=(B, kd),
            in_specs=[
                pl.BlockSpec((1, Np, d_block), lambda b, k: (b, 0, k)),
                pl.BlockSpec((1, d_block, Mp), lambda b, k: (b, k, 0)),
                pl.BlockSpec((1, K), lambda b, k: (0, 0)),
                pl.BlockSpec((1, K), lambda b, k: (0, 0)),
            ],
            out_specs=pl.BlockSpec((1, 1, K), lambda b, k: (b, 0, 0)),
            scratch_shapes=[
                pltpu.VMEM((Np, Mp), f32),   # s_acc
                pltpu.VMEM((Np, 1), f32),    # row max
                pltpu.VMEM((Np, 1), f32),    # row sum -> 1/row sum
                pltpu.VMEM((1, Mp), f32),    # col max
                pltpu.VMEM((1, Mp), f32),    # col sum -> 1/col sum
            ],
        ),
        compiler_params=pltpu.CompilerParams(
            dimension_semantics=("parallel", "arbitrary"),
            vmem_limit_bytes=vmem_limit,
        ),
    )(zxp, zytp, theta2d, beta2d)
    return out.reshape(B, K)


def ordinal_regression_forward(z_x, z_y, theta, beta):
    """Single pair, matching OrdinalRegression.score: (N, D), (M, D) -> (K,)."""
    return ordinal_regression_forward_batched(z_x[None], z_y[None], theta, beta)[0]


def _reference_forward(z_x, z_y, theta, beta):
    # Pure-JAX reference of the same math (correctness check).
    s = -jnp.sum(jnp.abs(z_x[:, None, :] - z_y[None, :, :]), axis=-1)
    a = jax.nn.softmax(s, axis=1)
    b = jax.nn.softmax(s, axis=0)
    a = a + b - a * b
    a = a / jnp.sum(a)
    c = jnp.sum(a * s)
    return (c * theta + beta.reshape(1, -1)).reshape(-1)


def _init_params(D, K):
    # Deterministic parameter init following OrdinalRegression.__init__ (compare=L1).
    ex = 2.0 * np.sqrt(2.0 / np.pi) * D
    var = 4.0 * (1.0 - 2.0 / np.pi) * D
    beta_init = ex / np.sqrt(var)
    theta = jnp.clip(jnp.ones((1, K), jnp.float32) / np.sqrt(var), 0.0, None)
    beta = jnp.zeros((K,), jnp.float32) + jnp.float32(beta_init)
    return theta, beta


if __name__ == "__main__":
    n_classes = 5
    K = n_classes - 1
    key = jax.random.PRNGKey(0)
    kx, ky, kx2, ky2 = jax.random.split(key, 4)

    # --- test 1: batched, non-aligned N/M/D (exercises row, column, and D padding) ---
    B, N, M, D = 2, 10, 23, 33
    theta, beta = _init_params(D, K)
    z_x = jax.random.normal(kx, (B, N, D), dtype=jnp.float32)
    z_y = jax.random.normal(ky, (B, M, D), dtype=jnp.float32)

    logits = ordinal_regression_forward_batched(z_x, z_y, theta, beta)
    jax.block_until_ready(logits)

    ref = jnp.stack(
        [_reference_forward(z_x[i], z_y[i], theta, beta) for i in range(B)]
    )
    assert logits.shape == (B, K)
    assert jnp.allclose(logits, ref, rtol=1e-3, atol=1e-3), (logits, ref)

    # --- test 2: single-pair path with D > 128 (multi-chunk reduction over D) ---
    N2, M2, D2 = 12, 20, 200
    theta2, beta2 = _init_params(D2, K)
    z_x2 = jax.random.normal(kx2, (N2, D2), dtype=jnp.float32)
    z_y2 = jax.random.normal(ky2, (M2, D2), dtype=jnp.float32)

    single = ordinal_regression_forward(z_x2, z_y2, theta2, beta2)
    jax.block_until_ready(single)
    ref2 = _reference_forward(z_x2, z_y2, theta2, beta2)
    assert single.shape == (K,)
    assert jnp.allclose(single, ref2, rtol=1e-3, atol=1e-3), (single, ref2)

    print("KERNEL_OK")
</pallas_src>

<mosaic_0001>
module attributes {stable_mosaic.version = 11 : i64} {
  func.func @kernel(%arg0: i32, %arg1: i32, %arg2: memref<1x16x40xf32, #tpu.memory_space<vmem>>, %arg3: memref<1x40x128xf32, #tpu.memory_space<vmem>>, %arg4: memref<1x4xf32, #tpu.memory_space<vmem>>, %arg5: memref<1x4xf32, #tpu.memory_space<vmem>>, %arg6: memref<1x1x4xf32, #tpu.memory_space<vmem>>, %arg7: memref<16x128xf32, #tpu.memory_space<vmem>>, %arg8: memref<16x1xf32, #tpu.memory_space<vmem>>, %arg9: memref<16x1xf32, #tpu.memory_space<vmem>>, %arg10: memref<1x128xf32, #tpu.memory_space<vmem>>, %arg11: memref<1x128xf32, #tpu.memory_space<vmem>>) attributes {dimension_semantics = [#tpu.dimension_semantics<parallel>, #tpu.dimension_semantics<arbitrary>], iteration_bounds = array<i64: 2, 1>, scalar_prefetch = 0 : i64, scratch_operands = 5 : i64, tpu.core_type = #tpu.core_type<tc>, window_params = [{transform_indices = @transform_0, window_bounds = array<i64: 1, 16, 40>}, {transform_indices = @transform_1, window_bounds = array<i64: 1, 40, 128>}, {pipeline_mode = #tpu.pipeline_mode<synchronous>, transform_indices = @transform_2, window_bounds = array<i64: 1, 4>}, {pipeline_mode = #tpu.pipeline_mode<synchronous>, transform_indices = @transform_3, window_bounds = array<i64: 1, 4>}, {transform_indices = @transform_4, window_bounds = array<i64: 1, 1, 4>}]} {
    %c0_i32 = arith.constant 0 : i32
    %c2_i32 = arith.constant 2 : i32
    %0 = arith.addi %c0_i32, %c2_i32 : i32
    %c1_i32 = arith.constant 1 : i32
    scf.for %arg12 = %c0_i32 to %0 step %c1_i32  : i32 {
      %c1_i32_3 = arith.constant 1 : i32
      %4 = arith.muli %arg12, %c1_i32_3 : i32
      %c0_i32_4 = arith.constant 0 : i32
      %5 = arith.addi %c0_i32_4, %4 : i32
      %c8_i32 = arith.constant 8 : i32
      %6 = arith.muli %5, %c8_i32 : i32
      %7 = tpu.assume_multiple %6, 8 : i32
      %c0 = arith.constant 0 : index
      %8 = arith.index_cast %7 : i32 to index
      %c0_5 = arith.constant 0 : index
      %9 = vector.load %arg2[%c0, %8, %c0_5] : memref<1x16x40xf32, #tpu.memory_space<vmem>>, vector<1x8x40xf32>
      %10 = vector.shape_cast %9 : vector<1x8x40xf32> to vector<8x40xf32>
      %cst = arith.constant 0.000000e+00 : f32
      %11 = vector.broadcast %cst : f32 to vector<8x128xf32>
      %cst_6 = arith.constant 0.000000e+00 : f32
      %12 = vector.broadcast %cst_6 : f32 to vector<8x128xf32>
      %cst_7 = arith.constant 0.000000e+00 : f32
      %13 = vector.broadcast %cst_7 : f32 to vector<8x128xf32>
      %cst_8 = arith.constant 0.000000e+00 : f32
      %14 = vector.broadcast %cst_8 : f32 to vector<8x128xf32>
      %15 = vector.extract_strided_slice %10 {offsets = [0, 0], sizes = [8, 1], strides = [1, 1]} : vector<8x40xf32> to vector<8x1xf32>
      %c0_9 = arith.constant 0 : index
      %c0_10 = arith.constant 0 : index
      %c0_11 = arith.constant 0 : index
      %16 = vector.load %arg3[%c0_9, %c0_10, %c0_11] : memref<1x40x128xf32, #tpu.memory_space<vmem>>, vector<1x1x128xf32>
      %17 = vector.shape_cast %16 : vector<1x1x128xf32> to vector<1x128xf32>
      %18 = vector.broadcast %15 : vector<8x1xf32> to vector<8x128xf32>
      %19 = vector.broadcast %17 : vector<1x128xf32> to vector<8x128xf32>
      %20 = arith.subf %18, %19 : vector<8x128xf32>
      %21 = math.absf %20 : vector<8x128xf32>
      %22 = arith.addf %11, %21 : vector<8x128xf32>
      %23 = vector.extract_strided_slice %10 {offsets = [0, 1], sizes = [8, 1], strides = [1, 1]} : vector<8x40xf32> to vector<8x1xf32>
      %c0_12 = arith.constant 0 : index
      %c1 = arith.constant 1 : index
      %c0_13 = arith.constant 0 : index
      %24 = vector.load %arg3[%c0_12, %c1, %c0_13] : memref<1x40x128xf32, #tpu.memory_space<vmem>>, vector<1x1x128xf32>
      %25 = vector.shape_cast %24 : vector<1x1x128xf32> to vector<1x128xf32>
      %26 = vector.broadcast %23 : vector<8x1xf32> to vector<8x128xf32>
      %27 = vector.broadcast %25 : vector<1x128xf32> to vector<8x128xf32>
      %28 = arith.subf %26, %27 : vector<8x128xf32>
      %29 = math.absf %28 : vector<8x128xf32>
      %30 = arith.addf %12, %29 : vector<8x128xf32>
      %31 = vector.extract_strided_slice %10 {offsets = [0, 2], sizes = [8, 1], strides = [1, 1]} : vector<8x40xf32> to vector<8x1xf32>
      %c0_14 = arith.constant 0 : index
      %c2 = arith.constant 2 : index
      %c0_15 = arith.constant 0 : index
      %32 = vector.load %arg3[%c0_14, %c2, %c0_15] : memref<1x40x128xf32, #tpu.memory_space<vmem>>, vector<1x1x128xf32>
      %33 = vector.shape_cast %32 : vector<1x1x128xf32> to vector<1x128xf32>
      %34 = vector.broadcast %31 : vector<8x1xf32> to vector<8x128xf32>
      %35 = vector.broadcast %33 : vector<1x128xf32> to vector<8x128xf32>
      %36 = arith.subf %34, %35 : vector<8x128xf32>
      %37 = math.absf %36 : vector<8x128xf32>
      %38 = arith.addf %13, %37 : vector<8x128xf32>
      %39 = vector.extract_strided_slice %10 {offsets = [0, 3], sizes = [8, 1], strides = [1, 1]} : vector<8x40xf32> to vector<8x1xf32>
      %c0_16 = arith.constant 0 : index
      %c3 = arith.constant 3 : index
      %c0_17 = arith.constant 0 : index
      %40 = vector.load %arg3[%c0_16, %c3, %c0_17] : memref<1x40x128xf32, #tpu.memory_space<vmem>>, vector<1x1x128xf32>
      %41 = vector.shape_cast %40 : vector<1x1x128xf32> to vector<1x128xf32>
      %42 = vector.broadcast %39 : vector<8x1xf32> to vector<8x128xf32>
      %43 = vector.broadcast %41 : vector<1x128xf32> to vector<8x128xf32>
      %44 = arith.subf %42, %43 : vector<8x128xf32>
      %45 = math.absf %44 : vector<8x128xf32>
      %46 = arith.addf %14, %45 : vector<8x128xf32>
      %47 = vector.extract_strided_slice %10 {offsets = [0, 4], sizes = [8, 1], strides = [1, 1]} : vector<8x40xf32> to vector<8x1xf32>
      %c0_18 = arith.constant 0 : index
      %c4 = arith.constant 4 : index
      %c0_19 = arith.constant 0 : index
      %48 = vector.load %arg3[%c0_18, %c4, %c0_19] : memref<1x40x128xf32, #tpu.memory_space<vmem>>, vector<1x1x128xf32>
      %49 = vector.shape_cast %48 : vector<1x1x128xf32> to vector<1x128xf32>
      %50 = vector.broadcast %47 : vector<8x1xf32> to vector<8x128xf32>
      %51 = vector.broadcast %49 : vector<1x128xf32> to vector<8x128xf32>
      %52 = arith.subf %50, %51 : vector<8x128xf32>
      %53 = math.absf %52 : vector<8x128xf32>
      %54 = arith.addf %22, %53 : vector<8x128xf32>
      %55 = vector.extract_strided_slice %10 {offsets = [0, 5], sizes = [8, 1], strides = [1, 1]} : vector<8x40xf32> to vector<8x1xf32>
      %c0_20 = arith.constant 0 : index
      %c5 = arith.constant 5 : index
      %c0_21 = arith.constant 0 : index
      %56 = vector.load %arg3[%c0_20, %c5, %c0_21] : memref<1x40x128xf32, #tpu.memory_space<vmem>>, vector<1x1x128xf32>
      %57 = vector.shape_cast %56 : vector<1x1x128xf32> to vector<1x128xf32>
      %58 = vector.broadcast %55 : vector<8x1xf32> to vector<8x128xf32>
      %59 = vector.broadcast %57 : vector<1x128xf32> to vector<8x128xf32>
      %60 = arith.subf %58, %59 : vector<8x128xf32>
      %61 = math.absf %60 : vector<8x128xf32>
      %62 = arith.addf %30, %61 : vector<8x128xf32>
      %63 = vector.extract_strided_slice %10 {offsets = [0, 6], sizes = [8, 1], strides = [1, 1]} : vector<8x40xf32> to vector<8x1xf32>
      %c0_22 = arith.constant 0 : index
      %c6 = arith.constant 6 : index
      %c0_23 = arith.constant 0 : index
      %64 = vector.load %arg3[%c0_22, %c6, %c0_23] : memref<1x40x128xf32, #tpu.memory_space<vmem>>, vector<1x1x128xf32>
      %65 = vector.shape_cast %64 : vector<1x1x128xf32> to vector<1x128xf32>
      %66 = vector.broadcast %63 : vector<8x1xf32> to vector<8x128xf32>
      %67 = vector.broadcast %65 : vector<1x128xf32> to vector<8x128xf32>
      %68 = arith.subf %66, %67 : vector<8x128xf32>
      %69 = math.absf %68 : vector<8x128xf32>
      %70 = arith.addf %38, %69 : vector<8x128xf32>
      %71 = vector.extract_strided_slice %10 {offsets = [0, 7], sizes = [8, 1], strides = [1, 1]} : vector<8x40xf32> to vector<8x1xf32>
      %c0_24 = arith.constant 0 : index
      %c7 = arith.constant 7 : index
      %c0_25 = arith.constant 0 : index
      %72 = vector.load %arg3[%c0_24, %c7, %c0_25] : memref<1x40x128xf32, #tpu.memory_space<vmem>>, vector<1x1x128xf32>
      %73 = vector.shape_cast %72 : vector<1x1x128xf32> to vector<1x128xf32>
      %74 = vector.broadcast %71 : vector<8x1xf32> to vector<8x128xf32>
      %75 = vector.broadcast %73 : vector<1x128xf32> to vector<8x128xf32>
      %76 = arith.subf %74, %75 : vector<8x128xf32>
      %77 = math.absf %76 : vector<8x128xf32>
      %78 = arith.addf %46, %77 : vector<8x128xf32>
      %79 = vector.extract_strided_slice %10 {offsets = [0, 8], sizes = [8, 1], strides = [1, 1]} : vector<8x40xf32> to vector<8x1xf32>
      %c0_26 = arith.constant 0 : index
      %c8 = arith.constant 8 : index
      %c0_27 = arith.constant 0 : index
      %80 = vector.load %arg3[%c0_26, %c8, %c0_27] : memref<1x40x128xf32, #tpu.memory_space<vmem>>, vector<1x1x128xf32>
      %81 = vector.shape_cast %80 : vector<1x1x128xf32> to vector<1x128xf32>
      %82 = vector.broadcast %79 : vector<8x1xf32> to vector<8x128xf32>
      %83 = vector.broadcast %81 : vector<1x128xf32> to vector<8x128xf32>
      %84 = arith.subf %82, %83 : vector<8x128xf32>
      %85 = math.absf %84 : vector<8x128xf32>
      %86 = arith.addf %54, %85 : vector<8x128xf32>
      %87 = vector.extract_strided_slice %10 {offsets = [0, 9], sizes = [8, 1], strides = [1, 1]} : vector<8x40xf32> to vector<8x1xf32>
      %c0_28 = arith.constant 0 : index
      %c9 = arith.constant 9 : index
      %c0_29 = arith.constant 0 : index
      %88 = vector.load %arg3[%c0_28, %c9, %c0_29] : memref<1x40x128xf32, #tpu.memory_space<vmem>>, vector<1x1x128xf32>
      %89 = vector.shape_cast %88 : vector<1x1x128xf32> to vector<1x128xf32>
      %90 = vector.broadcast %87 : vector<8x1xf32> to vector<8x128xf32>
      %91 = vector.broadcast %89 : vector<1x128xf32> to vector<8x128xf32>
      %92 = arith.subf %90, %91 : vector<8x128xf32>
      %93 = math.absf %92 : vector<8x128xf32>
      %94 = arith.addf %62, %93 : vector<8x128xf32>
      %95 = vector.extract_strided_slice %10 {offsets = [0, 10], sizes = [8, 1], strides = [1, 1]} : vector<8x40xf32> to vector<8x1xf32>
      %c0_30 = arith.constant 0 : index
      %c10 = arith.constant 10 : index
      %c0_31 = arith.constant 0 : index
      %96 = vector.load %arg3[%c0_30, %c10, %c0_31] : memref<1x40x128xf32, #tpu.memory_space<vmem>>, vector<1x1x128xf32>
      %97 = vector.shape_cast %96 : vector<1x1x128xf32> to vector<1x128xf32>
      %98 = vector.broadcast %95 : vector<8x1xf32> to vector<8x128xf32>
      %99 = vector.broadcast %97 : vector<1x128xf32> to vector<8x128xf32>
      %100 = arith.subf %98, %99 : vector<8x128xf32>
      %101 = math.absf %100 : vector<8x128xf32>
      %102 = arith.addf %70, %101 : vector<8x128xf32>
      %103 = vector.extract_strided_slice %10 {offsets = [0, 11], sizes = [8, 1], strides = [1, 1]} : vector<8x40xf32> to vector<8x1xf32>
      %c0_32 = arith.constant 0 : index
      %c11 = arith.constant 11 : index
      %c0_33 = arith.constant 0 : index
      %104 = vector.load %arg3[%c0_32, %c11, %c0_33] : memref<1x40x128xf32, #tpu.memory_space<vmem>>, vector<1x1x128xf32>
      %105 = vector.shape_cast %104 : vector<1x1x128xf32> to vector<1x128xf32>
      %106 = vector.broadcast %103 : vector<8x1xf32> to vector<8x128xf32>
      %107 = vector.broadcast %105 : vector<1x128xf32> to vector<8x128xf32>
      %108 = arith.subf %106, %107 : vector<8x128xf32>
      %109 = math.absf %108 : vector<8x128xf32>
      %110 = arith.addf %78, %109 : vector<8x128xf32>
      %111 = vector.extract_strided_slice %10 {offsets = [0, 12], sizes = [8, 1], strides = [1, 1]} : vector<8x40xf32> to vector<8x1xf32>
      %c0_34 = arith.constant 0 : index
      %c12 = arith.constant 12 : index
      %c0_35 = arith.constant 0 : index
      %112 = vector.load %arg3[%c0_34, %c12, %c0_35] : memref<1x40x128xf32, #tpu.memory_space<vmem>>, vector<1x1x128xf32>
      %113 = vector.shape_cast %112 : vector<1x1x128xf32> to vector<1x128xf32>
      %114 = vector.broadcast %111 : vector<8x1xf32> to vector<8x128xf32>
      %115 = vector.broadcast %113 : vector<1x128xf32> to vector<8x128xf32>
      %116 = arith.subf %114, %115 : vector<8x128xf32>
      %117 = math.absf %116 : vector<8x128xf32>
      %118 = arith.addf %86, %117 : vector<8x128xf32>
      %119 = vector.extract_strided_slice %10 {offsets = [0, 13], sizes = [8, 1], strides = [1, 1]} : vector<8x40xf32> to vector<8x1xf32>
      %c0_36 = arith.constant 0 : index
      %c13 = arith.constant 13 : index
      %c0_37 = arith.constant 0 : index
      %120 = vector.load %arg3[%c0_36, %c13, %c0_37] : memref<1x40x128xf32, #tpu.memory_space<vmem>>, vector<1x1x128xf32>
      %121 = vector.shape_cast %120 : vector<1x1x128xf32> to vector<1x128xf32>
      %122 = vector.broadcast %119 : vector<8x1xf32> to vector<8x128xf32>
      %123 = vector.broadcast %121 : vector<1x128xf32> to vector<8x128xf32>
      %124 = arith.subf %122, %123 : vector<8x128xf32>
      %125 = math.absf %124 : vector<8x128xf32>
      %126 = arith.addf %94, %125 : vector<8x128xf32>
      %127 = vector.extract_strided_slice %10 {offsets = [0, 14], sizes = [8, 1], strides = [1, 1]} : vector<8x40xf32> to vector<8x1xf32>
      %c0_38 = arith.constant 0 : index
      %c14 = arith.constant 14 : index
      %c0_39 = arith.constant 0 : index
      %128 = vector.load %arg3[%c0_38, %c14, %c0_39] : memref<1x40x128xf32, #tpu.memory_space<vmem>>, vector<1x1x128xf32>
      %129 = vector.shape_cast %128 : vector<1x1x128xf32> to vector<1x128xf32>
      %130 = vector.broadcast %127 : vector<8x1xf32> to vector<8x128xf32>
      %131 = vector.broadcast %129 : vector<1x128xf32> to vector<8x128xf32>
      %132 = arith.subf %130, %131 : vector<8x128xf32>
      %133 = math.absf %132 : vector<8x128xf32>
      %134 = arith.addf %102, %133 : vector<8x128xf32>
      %135 = vector.extract_strided_slice %10 {offsets = [0, 15], sizes = [8, 1], strides = [1, 1]} : vector<8x40xf32> to vector<8x1xf32>
      %c0_40 = arith.constant 0 : index
      %c15 = arith.constant 15 : index
      %c0_41 = arith.constant 0 : index
      %136 = vector.load %arg3[%c0_40, %c15, %c0_41] : memref<1x40x128xf32, #tpu.memory_space<vmem>>, vector<1x1x128xf32>
      %137 = vector.shape_cast %136 : vector<1x1x128xf32> to vector<1x128xf32>
      %138 = vector.broadcast %135 : vector<8x1xf32> to vector<8x128xf32>
      %139 = vector.broadcast %137 : vector<1x128xf32> to vector<8x128xf32>
      %140 = arith.subf %138, %139 : vector<8x128xf32>
      %141 = math.absf %140 : vector<8x128xf32>
      %142 = arith.addf %110, %141 : vector<8x128xf32>
      %143 = vector.extract_strided_slice %10 {offsets = [0, 16], sizes = [8, 1], strides = [1, 1]} : vector<8x40xf32> to vector<8x1xf32>
      %c0_42 = arith.constant 0 : index
      %c16 = arith.constant 16 : index
      %c0_43 = arith.constant 0 : index
      %144 = vector.load %arg3[%c0_42, %c16, %c0_43] : memref<1x40x128xf32, #tpu.memory_space<vmem>>, vector<1x1x128xf32>
      %145 = vector.shape_cast %144 : vector<1x1x128xf32> to vector<1x128xf32>
      %146 = vector.broadcast %143 : vector<8x1xf32> to vector<8x128xf32>
      %147 = vector.broadcast %145 : vector<1x128xf32> to vector<8x128xf32>
      %148 = arith.subf %146, %147 : vector<8x128xf32>
      %149 = math.absf %148 : vector<8x128xf32>
      %150 = arith.addf %118, %149 : vector<8x128xf32>
      %151 = vector.extract_strided_slice %10 {offsets = [0, 17], sizes = [8, 1], strides = [1, 1]} : vector<8x40xf32> to vector<8x1xf32>
      %c0_44 = arith.constant 0 : index
      %c17 = arith.constant 17 : index
      %c0_45 = arith.constant 0 : index
      %152 = vector.load %arg3[%c0_44, %c17, %c0_45] : memref<1x40x128xf32, #tpu.memory_space<vmem>>, vector<1x1x128xf32>
      %153 = vector.shape_cast %152 : vector<1x1x128xf32> to vector<1x128xf32>
      %154 = vector.broadcast %151 : vector<8x1xf32> to vector<8x128xf32>
      %155 = vector.broadcast %153 : vector<1x128xf32> to vector<8x128xf32>
      %156 = arith.subf %154, %155 : vector<8x128xf32>
      %157 = math.absf %156 : vector<8x128xf32>
      %158 = arith.addf %126, %157 : vector<8x128xf32>
      %159 = vector.extract_strided_slice %10 {offsets = [0, 18], sizes = [8, 1], strides = [1, 1]} : vector<8x40xf32> to vector<8x1xf32>
      %c0_46 = arith.constant 0 : index
      %c18 = arith.constant 18 : index
      %c0_47 = arith.constant 0 : index
      %160 = vector.load %arg3[%c0_46, %c18, %c0_47] : memref<1x40x128xf32, #tpu.memory_space<vmem>>, vector<1x1x128xf32>
      %161 = vector.shape_cast %160 : vector<1x1x128xf32> to vector<1x128xf32>
      %162 = vector.broadcast %159 : vector<8x1xf32> to vector<8x128xf32>
      %163 = vector.broadcast %161 : vector<1x128xf32> to vector<8x128xf32>
      %164 = arith.subf %162, %163 : vector<8x128xf32>
      %165 = math.absf %164 : vector<8x128xf32>
      %166 = arith.addf %134, %165 : vector<8x128xf32>
      %167 = vector.extract_strided_slice %10 {offsets = [0, 19], sizes = [8, 1], strides = [1, 1]} : vector<8x40xf32> to vector<8x1xf32>
      %c0_48 = arith.constant 0 : index
      %c19 = arith.constant 19 : index
      %c0_49 = arith.constant 0 : index
      %168 = vector.load %arg3[%c0_48, %c19, %c0_49] : memref<1x40x128xf32, #tpu.memory_space<vmem>>, vector<1x1x128xf32>
      %169 = vector.shape_cast %168 : vector<1x1x128xf32> to vector<1x128xf32>
      %170 = vector.broadcast %167 : vector<8x1xf32> to vector<8x128xf32>
      %171 = vector.broadcast %169 : vector<1x128xf32> to vector<8x128xf32>
      %172 = arith.subf %170, %171 : vector<8x128xf32>
      %173 = math.absf %172 : vector<8x128xf32>
      %174 = arith.addf %142, %173 : vector<8x128xf32>
      %175 = vector.extract_strided_slice %10 {offsets = [0, 20], sizes = [8, 1], strides = [1, 1]} : vector<8x40xf32> to vector<8x1xf32>
      %c0_50 = arith.constant 0 : index
      %c20 = arith.constant 20 : index
      %c0_51 = arith.constant 0 : index
      %176 = vector.load %arg3[%c0_50, %c20, %c0_51] : memref<1x40x128xf32, #tpu.memory_space<vmem>>, vector<1x1x128xf32>
      %177 = vector.shape_cast %176 : vector<1x1x128xf32> to vector<1x128xf32>
      %178 = vector.broadcast %175 : vector<8x1xf32> to vector<8x128xf32>
      %179 = vector.broadcast %177 : vector<1x128xf32> to vector<8x128xf32>
      %180 = arith.subf %178, %179 : vector<8x128xf32>
      %181 = math.absf %180 : vector<8x128xf32>
      %182 = arith.addf %150, %181 : vector<8x128xf32>
      %183 = vector.extract_strided_slice %10 {offsets = [0, 21], sizes = [8, 1], strides = [1, 1]} : vector<8x40xf32> to vector<8x1xf32>
      %c0_52 = arith.constant 0 : index
      %c21 = arith.constant 21 : index
      %c0_53 = arith.constant 0 : index
      %184 = vector.load %arg3[%c0_52, %c21, %c0_53] : memref<1x40x128xf32, #tpu.memory_space<vmem>>, vector<1x1x128xf32>
      %185 = vector.shape_cast %184 : vector<1x1x128xf32> to vector<1x128xf32>
      %186 = vector.broadcast %183 : vector<8x1xf32> to vector<8x128xf32>
      %187 = vector.broadcast %185 : vector<1x128xf32> to vector<8x128xf32>
      %188 = arith.subf %186, %187 : vector<8x128xf32>
      %189 = math.absf %188 : vector<8x128xf32>
      %190 = arith.addf %158, %189 : vector<8x128xf32>
      %191 = vector.extract_strided_slice %10 {offsets = [0, 22], sizes = [8, 1], strides = [1, 1]} : vector<8x40xf32> to vector<8x1xf32>
      %c0_54 = arith.constant 0 : index
      %c22 = arith.constant 22 : index
      %c0_55 = arith.constant 0 : index
      %192 = vector.load %arg3[%c0_54, %c22, %c0_55] : memref<1x40x128xf32, #tpu.memory_space<vmem>>, vector<1x1x128xf32>
      %193 = vector.shape_cast %192 : vector<1x1x128xf32> to vector<1x128xf32>
      %194 = vector.broadcast %191 : vector<8x1xf32> to vector<8x128xf32>
      %195 = vector.broadcast %193 : vector<1x128xf32> to vector<8x128xf32>
      %196 = arith.subf %194, %195 : vector<8x128xf32>
      %197 = math.absf %196 : vector<8x128xf32>
      %198 = arith.addf %166, %197 : vector<8x128xf32>
      %199 = vector.extract_strided_slice %10 {offsets = [0, 23], sizes = [8, 1], strides = [1, 1]} : vector<8x40xf32> to vector<8x1xf32>
      %c0_56 = arith.constant 0 : index
      %c23 = arith.constant 23 : index
      %c0_57 = arith.constant 0 : index
      %200 = vector.load %arg3[%c0_56, %c23, %c0_57] : memref<1x40x128xf32, #tpu.memory_space<vmem>>, vector<1x1x128xf32>
      %201 = vector.shape_cast %200 : vector<1x1x128xf32> to vector<1x128xf32>
      %202 = vector.broadcast %199 : vector<8x1xf32> to vector<8x128xf32>
      %203 = vector.broadcast %201 : vector<1x128xf32> to vector<8x128xf32>
      %204 = arith.subf %202, %203 : vector<8x128xf32>
      %205 = math.absf %204 : vector<8x128xf32>
      %206 = arith.addf %174, %205 : vector<8x128xf32>
      %207 = vector.extract_strided_slice %10 {offsets = [0, 24], sizes = [8, 1], strides = [1, 1]} : vector<8x40xf32> to vector<8x1xf32>
      %c0_58 = arith.constant 0 : index
      %c24 = arith.constant 24 : index
      %c0_59 = arith.constant 0 : index
      %208 = vector.load %arg3[%c0_58, %c24, %c0_59] : memref<1x40x128xf32, #tpu.memory_space<vmem>>, vector<1x1x128xf32>
      %209 = vector.shape_cast %208 : vector<1x1x128xf32> to vector<1x128xf32>
      %210 = vector.broadcast %207 : vector<8x1xf32> to vector<8x128xf32>
      %211 = vector.broadcast %209 : vector<1x128xf32> to vector<8x128xf32>
      %212 = arith.subf %210, %211 : vector<8x128xf32>
      %213 = math.absf %212 : vector<8x128xf32>
      %214 = arith.addf %182, %213 : vector<8x128xf32>
      %215 = vector.extract_strided_slice %10 {offsets = [0, 25], sizes = [8, 1], strides = [1, 1]} : vector<8x40xf32> to vector<8x1xf32>
      %c0_60 = arith.constant 0 : index
      %c25 = arith.constant 25 : index
      %c0_61 = arith.constant 0 : index
      %216 = vector.load %arg3[%c0_60, %c25, %c0_61] : memref<1x40x128xf32, #tpu.memory_space<vmem>>, vector<1x1x128xf32>
      %217 = vector.shape_cast %216 : vector<1x1x128xf32> to vector<1x128xf32>
      %218 = vector.broadcast %215 : vector<8x1xf32> to vector<8x128xf32>
      %219 = vector.broadcast %217 : vector<1x128xf32> to vector<8x128xf32>
      %220 = arith.subf %218, %219 : vector<8x128xf32>
      %221 = math.absf %220 : vector<8x128xf32>
      %222 = arith.addf %190, %221 : vector<8x128xf32>
      %223 = vector.extract_strided_slice %10 {offsets = [0, 26], sizes = [8, 1], strides = [1, 1]} : vector<8x40xf32> to vector<8x1xf32>
      %c0_62 = arith.constant 0 : index
      %c26 = arith.constant 26 : index
      %c0_63 = arith.constant 0 : index
      %224 = vector.load %arg3[%c0_62, %c26, %c0_63] : memref<1x40x128xf32, #tpu.memory_space<vmem>>, vector<1x1x128xf32>
      %225 = vector.shape_cast %224 : vector<1x1x128xf32> to vector<1x128xf32>
      %226 = vector.broadcast %223 : vector<8x1xf32> to vector<8x128xf32>
      %227 = vector.broadcast %225 : vector<1x128xf32> to vector<8x128xf32>
      %228 = arith.subf %226, %227 : vector<8x128xf32>
      %229 = math.absf %228 : vector<8x128xf32>
      %230 = arith.addf %198, %229 : vector<8x128xf32>
      %231 = vector.extract_strided_slice %10 {offsets = [0, 27], sizes = [8, 1], strides = [1, 1]} : vector<8x40xf32> to vector<8x1xf32>
      %c0_64 = arith.constant 0 : index
      %c27 = arith.constant 27 : index
      %c0_65 = arith.constant 0 : index
      %232 = vector.load %arg3[%c0_64, %c27, %c0_65] : memref<1x40x128xf32, #tpu.memory_space<vmem>>, vector<1x1x128xf32>
      %233 = vector.shape_cast %232 : vector<1x1x128xf32> to vector<1x128xf32>
      %234 = vector.broadcast %231 : vector<8x1xf32> to vector<8x128xf32>
      %235 = vector.broadcast %233 : vector<1x128xf32> to vector<8x128xf32>
      %236 = arith.subf %234, %235 : vector<8x128xf32>
      %237 = math.absf %236 : vector<8x128xf32>
      %238 = arith.addf %206, %237 : vector<8x128xf32>
      %239 = vector.extract_strided_slice %10 {offsets = [0, 28], sizes = [8, 1], strides = [1, 1]} : vector<8x40xf32> to vector<8x1xf32>
      %c0_66 = arith.constant 0 : index
      %c28 = arith.constant 28 : index
      %c0_67 = arith.constant 0 : index
      %240 = vector.load %arg3[%c0_66, %c28, %c0_67] : memref<1x40x128xf32, #tpu.memory_space<vmem>>, vector<1x1x128xf32>
      %241 = vector.shape_cast %240 : vector<1x1x128xf32> to vector<1x128xf32>
      %242 = vector.broadcast %239 : vector<8x1xf32> to vector<8x128xf32>
      %243 = vector.broadcast %241 : vector<1x128xf32> to vector<8x128xf32>
      %244 = arith.subf %242, %243 : vector<8x128xf32>
      %245 = math.absf %244 : vector<8x128xf32>
      %246 = arith.addf %214, %245 : vector<8x128xf32>
      %247 = vector.extract_strided_slice %10 {offsets = [0, 29], sizes = [8, 1], strides = [1, 1]} : vector<8x40xf32> to vector<8x1xf32>
      %c0_68 = arith.constant 0 : index
      %c29 = arith.constant 29 : index
      %c0_69 = arith.constant 0 : index
      %248 = vector.load %arg3[%c0_68, %c29, %c0_69] : memref<1x40x128xf32, #tpu.memory_space<vmem>>, vector<1x1x128xf32>
      %249 = vector.shape_cast %248 : vector<1x1x128xf32> to vector<1x128xf32>
      %250 = vector.broadcast %247 : vector<8x1xf32> to vector<8x128xf32>
      %251 = vector.broadcast %249 : vector<1x128xf32> to vector<8x128xf32>
      %252 = arith.subf %250, %251 : vector<8x128xf32>
      %253 = math.absf %252 : vector<8x128xf32>
      %254 = arith.addf %222, %253 : vector<8x128xf32>
      %255 = vector.extract_strided_slice %10 {offsets = [0, 30], sizes = [8, 1], strides = [1, 1]} : vector<8x40xf32> to vector<8x1xf32>
      %c0_70 = arith.constant 0 : index
      %c30 = arith.constant 30 : index
      %c0_71 = arith.constant 0 : index
      %256 = vector.load %arg3[%c0_70, %c30, %c0_71] : memref<1x40x128xf32, #tpu.memory_space<vmem>>, vector<1x1x128xf32>
      %257 = vector.shape_cast %256 : vector<1x1x128xf32> to vector<1x128xf32>
      %258 = vector.broadcast %255 : vector<8x1xf32> to vector<8x128xf32>
      %259 = vector.broadcast %257 : vector<1x128xf32> to vector<8x128xf32>
      %260 = arith.subf %258, %259 : vector<8x128xf32>
      %261 = math.absf %260 : vector<8x128xf32>
      %262 = arith.addf %230, %261 : vector<8x128xf32>
      %263 = vector.extract_strided_slice %10 {offsets = [0, 31], sizes = [8, 1], strides = [1, 1]} : vector<8x40xf32> to vector<8x1xf32>
      %c0_72 = arith.constant 0 : index
      %c31 = arith.constant 31 : index
      %c0_73 = arith.constant 0 : index
      %264 = vector.load %arg3[%c0_72, %c31, %c0_73] : memref<1x40x128xf32, #tpu.memory_space<vmem>>, vector<1x1x128xf32>
      %265 = vector.shape_cast %264 : vector<1x1x128xf32> to vector<1x128xf32>
      %266 = vector.broadcast %263 : vector<8x1xf32> to vector<8x128xf32>
      %267 = vector.broadcast %265 : vector<1x128xf32> to vector<8x128xf32>
      %268 = arith.subf %266, %267 : vector<8x128xf32>
      %269 = math.absf %268 : vector<8x128xf32>
      %270 = arith.addf %238, %269 : vector<8x128xf32>
      %271 = vector.extract_strided_slice %10 {offsets = [0, 32], sizes = [8, 1], strides = [1, 1]} : vector<8x40xf32> to vector<8x1xf32>
      %c0_74 = arith.constant 0 : index
      %c32 = arith.constant 32 : index
      %c0_75 = arith.constant 0 : index
      %272 = vector.load %arg3[%c0_74, %c32, %c0_75] : memref<1x40x128xf32, #tpu.memory_space<vmem>>, vector<1x1x128xf32>
      %273 = vector.shape_cast %272 : vector<1x1x128xf32> to vector<1x128xf32>
      %274 = vector.broadcast %271 : vector<8x1xf32> to vector<8x128xf32>
      %275 = vector.broadcast %273 : vector<1x128xf32> to vector<8x128xf32>
      %276 = arith.subf %274, %275 : vector<8x128xf32>
      %277 = math.absf %276 : vector<8x128xf32>
      %278 = arith.addf %246, %277 : vector<8x128xf32>
      %279 = vector.extract_strided_slice %10 {offsets = [0, 33], sizes = [8, 1], strides = [1, 1]} : vector<8x40xf32> to vector<8x1xf32>
      %c0_76 = arith.constant 0 : index
      %c33 = arith.constant 33 : index
      %c0_77 = arith.constant 0 : index
      %280 = vector.load %arg3[%c0_76, %c33, %c0_77] : memref<1x40x128xf32, #tpu.memory_space<vmem>>, vector<1x1x128xf32>
      %281 = vector.shape_cast %280 : vector<1x1x128xf32> to vector<1x128xf32>
      %282 = vector.broadcast %279 : vector<8x1xf32> to vector<8x128xf32>
      %283 = vector.broadcast %281 : vector<1x128xf32> to vector<8x128xf32>
      %284 = arith.subf %282, %283 : vector<8x128xf32>
      %285 = math.absf %284 : vector<8x128xf32>
      %286 = arith.addf %254, %285 : vector<8x128xf32>
      %287 = vector.extract_strided_slice %10 {offsets = [0, 34], sizes = [8, 1], strides = [1, 1]} : vector<8x40xf32> to vector<8x1xf32>
      %c0_78 = arith.constant 0 : index
      %c34 = arith.constant 34 : index
      %c0_79 = arith.constant 0 : index
      %288 = vector.load %arg3[%c0_78, %c34, %c0_79] : memref<1x40x128xf32, #tpu.memory_space<vmem>>, vector<1x1x128xf32>
      %289 = vector.shape_cast %288 : vector<1x1x128xf32> to vector<1x128xf32>
      %290 = vector.broadcast %287 : vector<8x1xf32> to vector<8x128xf32>
      %291 = vector.broadcast %289 : vector<1x128xf32> to vector<8x128xf32>
      %292 = arith.subf %290, %291 : vector<8x128xf32>
      %293 = math.absf %292 : vector<8x128xf32>
      %294 = arith.addf %262, %293 : vector<8x128xf32>
      %295 = vector.extract_strided_slice %10 {offsets = [0, 35], sizes = [8, 1], strides = [1, 1]} : vector<8x40xf32> to vector<8x1xf32>
      %c0_80 = arith.constant 0 : index
      %c35 = arith.constant 35 : index
      %c0_81 = arith.constant 0 : index
      %296 = vector.load %arg3[%c0_80, %c35, %c0_81] : memref<1x40x128xf32, #tpu.memory_space<vmem>>, vector<1x1x128xf32>
      %297 = vector.shape_cast %296 : vector<1x1x128xf32> to vector<1x128xf32>
      %298 = vector.broadcast %295 : vector<8x1xf32> to vector<8x128xf32>
      %299 = vector.broadcast %297 : vector<1x128xf32> to vector<8x128xf32>
      %300 = arith.subf %298, %299 : vector<8x128xf32>
      %301 = math.absf %300 : vector<8x128xf32>
      %302 = arith.addf %270, %301 : vector<8x128xf32>
      %303 = vector.extract_strided_slice %10 {offsets = [0, 36], sizes = [8, 1], strides = [1, 1]} : vector<8x40xf32> to vector<8x1xf32>
      %c0_82 = arith.constant 0 : index
      %c36 = arith.constant 36 : index
      %c0_83 = arith.constant 0 : index
      %304 = vector.load %arg3[%c0_82, %c36, %c0_83] : memref<1x40x128xf32, #tpu.memory_space<vmem>>, vector<1x1x128xf32>
      %305 = vector.shape_cast %304 : vector<1x1x128xf32> to vector<1x128xf32>
      %306 = vector.broadcast %303 : vector<8x1xf32> to vector<8x128xf32>
      %307 = vector.broadcast %305 : vector<1x128xf32> to vector<8x128xf32>
      %308 = arith.subf %306, %307 : vector<8x128xf32>
      %309 = math.absf %308 : vector<8x128xf32>
      %310 = arith.addf %278, %309 : vector<8x128xf32>
      %311 = vector.extract_strided_slice %10 {offsets = [0, 37], sizes = [8, 1], strides = [1, 1]} : vector<8x40xf32> to vector<8x1xf32>
      %c0_84 = arith.constant 0 : index
      %c37 = arith.constant 37 : index
      %c0_85 = arith.constant 0 : index
      %312 = vector.load %arg3[%c0_84, %c37, %c0_85] : memref<1x40x128xf32, #tpu.memory_space<vmem>>, vector<1x1x128xf32>
      %313 = vector.shape_cast %312 : vector<1x1x128xf32> to vector<1x128xf32>
      %314 = vector.broadcast %311 : vector<8x1xf32> to vector<8x128xf32>
      %315 = vector.broadcast %313 : vector<1x128xf32> to vector<8x128xf32>
      %316 = arith.subf %314, %315 : vector<8x128xf32>
      %317 = math.absf %316 : vector<8x128xf32>
      %318 = arith.addf %286, %317 : vector<8x128xf32>
      %319 = vector.extract_strided_slice %10 {offsets = [0, 38], sizes = [8, 1], strides = [1, 1]} : vector<8x40xf32> to vector<8x1xf32>
      %c0_86 = arith.constant 0 : index
      %c38 = arith.constant 38 : index
      %c0_87 = arith.constant 0 : index
      %320 = vector.load %arg3[%c0_86, %c38, %c0_87] : memref<1x40x128xf32, #tpu.memory_space<vmem>>, vector<1x1x128xf32>
      %321 = vector.shape_cast %320 : vector<1x1x128xf32> to vector<1x128xf32>
      %322 = vector.broadcast %319 : vector<8x1xf32> to vector<8x128xf32>
      %323 = vector.broadcast %321 : vector<1x128xf32> to vector<8x128xf32>
      %324 = arith.subf %322, %323 : vector<8x128xf32>
      %325 = math.absf %324 : vector<8x128xf32>
      %326 = arith.addf %294, %325 : vector<8x128xf32>
      %327 = vector.extract_strided_slice %10 {offsets = [0, 39], sizes = [8, 1], strides = [1, 1]} : vector<8x40xf32> to vector<8x1xf32>
      %c0_88 = arith.constant 0 : index
      %c39 = arith.constant 39 : index
      %c0_89 = arith.constant 0 : index
      %328 = vector.load %arg3[%c0_88, %c39, %c0_89] : memref<1x40x128xf32, #tpu.memory_space<vmem>>, vector<1x1x128xf32>
      %329 = vector.shape_cast %328 : vector<1x1x128xf32> to vector<1x128xf32>
      %330 = vector.broadcast %327 : vector<8x1xf32> to vector<8x128xf32>
      %331 = vector.broadcast %329 : vector<1x128xf32> to vector<8x128xf32>
      %332 = arith.subf %330, %331 : vector<8x128xf32>
      %333 = math.absf %332 : vector<8x128xf32>
      %334 = arith.addf %302, %333 : vector<8x128xf32>
      %335 = arith.addf %310, %318 : vector<8x128xf32>
      %336 = arith.addf %335, %326 : vector<8x128xf32>
      %337 = arith.addf %336, %334 : vector<8x128xf32>
      %cst_90 = arith.constant 0.000000e+00 : f32
      %338 = vector.broadcast %cst_90 : f32 to vector<8x128xf32>
      %339 = arith.subf %338, %337 : vector<8x128xf32>
      %340 = arith.index_cast %7 : i32 to index
      %c0_91 = arith.constant 0 : index
      %341 = vector.load %arg7[%340, %c0_91] : memref<16x128xf32, #tpu.memory_space<vmem>>, vector<8x128xf32>
      tpu.vector_store %arg7[%340, %c0_91], %339 {strides = array<i32>} : memref<16x128xf32, #tpu.memory_space<vmem>>, vector<8x128xf32>,
    }
    %c2_i32_0 = arith.constant 2 : i32
    %c0_i32_1 = arith.constant 0 : i32
    %1 = arith.cmpi eq, %arg1, %c0_i32_1 : i32
    %2 = arith.extui %1 : i1 to i32
    %c0_i32_2 = arith.constant 0 : i32
    %3 = arith.cmpi ne, %2, %c0_i32_2 : i32
    scf.if %3 {
      %4 = tpu.iota {dimensions = array<i32: 1>} : vector<1x128xi32>
      %c23_i32 = arith.constant 23 : i32
      %5 = vector.broadcast %c23_i32 : i32 to vector<1x128xi32>
      %6 = arith.cmpi slt, %4, %5 : vector<1x128xi32>
      %cst = arith.constant -1.000000e+30 : f32
      %7 = vector.broadcast %cst : f32 to vector<1x128xf32>
      %c0 = arith.constant 0 : index
      %c0_3 = arith.constant 0 : index
      %8 = vector.load %arg10[%c0, %c0_3] : memref<1x128xf32, #tpu.memory_space<vmem>>, vector<1x128xf32>
      tpu.vector_store %arg10[%c0, %c0_3], %7 {strides = array<i32>} : memref<1x128xf32, #tpu.memory_space<vmem>>, vector<1x128xf32>,
      %cst_4 = arith.constant 0.000000e+00 : f32
      %9 = vector.broadcast %cst_4 : f32 to vector<1x128xf32>
      %c0_5 = arith.constant 0 : index
      %c0_6 = arith.constant 0 : index
      %10 = vector.load %arg11[%c0_5, %c0_6] : memref<1x128xf32, #tpu.memory_space<vmem>>, vector<1x128xf32>
      tpu.vector_store %arg11[%c0_5, %c0_6], %9 {strides = array<i32>} : memref<1x128xf32, #tpu.memory_space<vmem>>, vector<1x128xf32>,
      %c0_i32_7 = arith.constant 0 : i32
      %c2_i32_8 = arith.constant 2 : i32
      %11 = arith.addi %c0_i32_7, %c2_i32_8 : i32
      %c1_i32_9 = arith.constant 1 : i32
      scf.for %arg12 = %c0_i32_7 to %11 step %c1_i32_9  : i32 {
        %c1_i32_38 = arith.constant 1 : i32
        %34 = arith.muli %arg12, %c1_i32_38 : i32
        %c0_i32_39 = arith.constant 0 : i32
        %35 = arith.addi %c0_i32_39, %34 : i32
        %c8_i32 = arith.constant 8 : i32
        %36 = arith.muli %35, %c8_i32 : i32
        %37 = tpu.assume_multiple %36, 8 : i32
        %38 = arith.index_cast %37 : i32 to index
        %c0_40 = arith.constant 0 : index
        %39 = vector.load %arg7[%38, %c0_40] : memref<16x128xf32, #tpu.memory_space<vmem>>, vector<8x128xf32>
        %40 = tpu.iota {dimensions = array<i32: 0>} : vector<8x1xi32>
        %41 = vector.broadcast %37 : i32 to vector<8x1xi32>
        %42 = arith.addi %41, %40 : vector<8x1xi32>
        %c10_i32 = arith.constant 10 : i32
        %43 = vector.broadcast %c10_i32 : i32 to vector<8x1xi32>
        %44 = arith.cmpi slt, %42, %43 : vector<8x1xi32>
        %cst_41 = arith.constant -1.000000e+30 : f32
        %45 = vector.shape_cast %6 : vector<1x128xi1> to vector<1x128xi1>
        %46 = vector.broadcast %45 : vector<1x128xi1> to vector<8x128xi1>
        %47 = vector.broadcast %cst_41 : f32 to vector<8x128xf32>
        %48 = arith.select %46, %39, %47 : vector<8x128xi1>, vector<8x128xf32>
        %cst_42 = arith.constant dense<0xFF800000> : vector<8xf32>
        %49 = vector.multi_reduction <maximumf>, %48, %cst_42 [1] : vector<8x128xf32> to vector<8xf32>
        %50 = vector.shape_cast %49 : vector<8xf32> to vector<8x1xf32>
        %51 = arith.index_cast %37 : i32 to index
        %c0_43 = arith.constant 0 : index
        %52 = vector.load %arg8[%51, %c0_43] : memref<16x1xf32, #tpu.memory_space<vmem>>, vector<8x1xf32>
        tpu.vector_store %arg8[%51, %c0_43], %50 {strides = array<i32>} : memref<16x1xf32, #tpu.memory_space<vmem>>, vector<8x1xf32>,
        %c0_44 = arith.constant 0 : index
        %c0_45 = arith.constant 0 : index
        %53 = vector.load %arg10[%c0_44, %c0_45] : memref<1x128xf32, #tpu.memory_space<vmem>>, vector<1x128xf32>
        %cst_46 = arith.constant -1.000000e+30 : f32
        %54 = vector.shape_cast %44 : vector<8x1xi1> to vector<8x1xi1>
        %55 = vector.broadcast %54 : vector<8x1xi1> to vector<8x128xi1>
        %56 = vector.broadcast %cst_46 : f32 to vector<8x128xf32>
        %57 = arith.select %55, %39, %56 : vector<8x128xi1>, vector<8x128xf32>
        %cst_47 = arith.constant dense<0xFF800000> : vector<128xf32>
        %58 = vector.multi_reduction <maximumf>, %57, %cst_47 [0] : vector<8x128xf32> to vector<128xf32>
        %59 = vector.shape_cast %58 : vector<128xf32> to vector<1x128xf32>
        %60 = arith.maximumf %53, %59 : vector<1x128xf32>
        %c0_48 = arith.constant 0 : index
        %c0_49 = arith.constant 0 : index
        %61 = vector.load %arg10[%c0_48, %c0_49] : memref<1x128xf32, #tpu.memory_space<vmem>>, vector<1x128xf32>
        tpu.vector_store %arg10[%c0_48, %c0_49], %60 {strides = array<i32>} : memref<1x128xf32, #tpu.memory_space<vmem>>, vector<1x128xf32>,
      }
      %c2_i32_10 = arith.constant 2 : i32
      %c0_i32_11 = arith.constant 0 : i32
      %c2_i32_12 = arith.constant 2 : i32
      %12 = arith.addi %c0_i32_11, %c2_i32_12 : i32
      %c1_i32_13 = arith.constant 1 : i32
      scf.for %arg12 = %c0_i32_11 to %12 step %c1_i32_13  : i32 {
        %c1_i32_38 = arith.constant 1 : i32
        %34 = arith.muli %arg12, %c1_i32_38 : i32
        %c0_i32_39 = arith.constant 0 : i32
        %35 = arith.addi %c0_i32_39, %34 : i32
        %c8_i32 = arith.constant 8 : i32
        %36 = arith.muli %35, %c8_i32 : i32
        %37 = tpu.assume_multiple %36, 8 : i32
        %38 = arith.index_cast %37 : i32 to index
        %c0_40 = arith.constant 0 : index
        %39 = vector.load %arg7[%38, %c0_40] : memref<16x128xf32, #tpu.memory_space<vmem>>, vector<8x128xf32>
        %40 = tpu.iota {dimensions = array<i32: 0>} : vector<8x1xi32>
        %41 = vector.broadcast %37 : i32 to vector<8x1xi32>
        %42 = arith.addi %41, %40 : vector<8x1xi32>
        %c10_i32 = arith.constant 10 : i32
        %43 = vector.broadcast %c10_i32 : i32 to vector<8x1xi32>
        %44 = arith.cmpi slt, %42, %43 : vector<8x1xi32>
        %45 = arith.index_cast %37 : i32 to index
        %c0_41 = arith.constant 0 : index
        %46 = vector.load %arg8[%45, %c0_41] : memref<16x1xf32, #tpu.memory_space<vmem>>, vector<8x1xf32>
        %47 = vector.broadcast %46 : vector<8x1xf32> to vector<8x128xf32>
        %48 = arith.subf %39, %47 : vector<8x128xf32>
        %49 = math.exp %48 : vector<8x128xf32>
        %cst_42 = arith.constant 0.000000e+00 : f32
        %50 = vector.shape_cast %6 : vector<1x128xi1> to vector<1x128xi1>
        %51 = vector.broadcast %50 : vector<1x128xi1> to vector<8x128xi1>
        %52 = vector.broadcast %cst_42 : f32 to vector<8x128xf32>
        %53 = arith.select %51, %49, %52 : vector<8x128xi1>, vector<8x128xf32>
        %cst_43 = arith.constant dense<0.000000e+00> : vector<8xf32>
        %54 = vector.multi_reduction <add>, %53, %cst_43 [1] : vector<8x128xf32> to vector<8xf32>
        %55 = vector.shape_cast %54 : vector<8xf32> to vector<8x1xf32>
        %56 = arith.index_cast %37 : i32 to index
        %c0_44 = arith.constant 0 : index
        %57 = vector.load %arg9[%56, %c0_44] : memref<16x1xf32, #tpu.memory_space<vmem>>, vector<8x1xf32>
        tpu.vector_store %arg9[%56, %c0_44], %55 {strides = array<i32>} : memref<16x1xf32, #tpu.memory_space<vmem>>, vector<8x1xf32>,
        %c0_45 = arith.constant 0 : index
        %c0_46 = arith.constant 0 : index
        %58 = vector.load %arg10[%c0_45, %c0_46] : memref<1x128xf32, #tpu.memory_space<vmem>>, vector<1x128xf32>
        %59 = vector.broadcast %58 : vector<1x128xf32> to vector<8x128xf32>
        %60 = arith.subf %39, %59 : vector<8x128xf32>
        %61 = math.exp %60 : vector<8x128xf32>
        %cst_47 = arith.constant 0.000000e+00 : f32
        %62 = vector.shape_cast %44 : vector<8x1xi1> to vector<8x1xi1>
        %63 = vector.broadcast %62 : vector<8x1xi1> to vector<8x128xi1>
        %64 = vector.broadcast %cst_47 : f32 to vector<8x128xf32>
        %65 = arith.select %63, %61, %64 : vector<8x128xi1>, vector<8x128xf32>
        %c0_48 = arith.constant 0 : index
        %c0_49 = arith.constant 0 : index
        %66 = vector.load %arg11[%c0_48, %c0_49] : memref<1x128xf32, #tpu.memory_space<vmem>>, vector<1x128xf32>
        %cst_50 = arith.constant dense<0.000000e+00> : vector<128xf32>
        %67 = vector.multi_reduction <add>, %65, %cst_50 [0] : vector<8x128xf32> to vector<128xf32>
        %68 = vector.shape_cast %67 : vector<128xf32> to vector<1x128xf32>
        %69 = arith.addf %66, %68 : vector<1x128xf32>
        %c0_51 = arith.constant 0 : index
        %c0_52 = arith.constant 0 : index
        %70 = vector.load %arg11[%c0_51, %c0_52] : memref<1x128xf32, #tpu.memory_space<vmem>>, vector<1x128xf32>
        tpu.vector_store %arg11[%c0_51, %c0_52], %69 {strides = array<i32>} : memref<1x128xf32, #tpu.memory_space<vmem>>, vector<1x128xf32>,
      }
      %c2_i32_14 = arith.constant 2 : i32
      %c0_15 = arith.constant 0 : index
      %c0_16 = arith.constant 0 : index
      %13 = vector.load %arg9[%c0_15, %c0_16] : memref<16x1xf32, #tpu.memory_space<vmem>>, vector<16x1xf32>
      %cst_17 = arith.constant 1.000000e+00 : f32
      %14 = vector.broadcast %cst_17 : f32 to vector<16x1xf32>
      %15 = arith.divf %14, %13 : vector<16x1xf32>
      %c0_18 = arith.constant 0 : index
      %c0_19 = arith.constant 0 : index
      %16 = vector.load %arg9[%c0_18, %c0_19] : memref<16x1xf32, #tpu.memory_space<vmem>>, vector<16x1xf32>
      tpu.vector_store %arg9[%c0_18, %c0_19], %15 {strides = array<i32>} : memref<16x1xf32, #tpu.memory_space<vmem>>, vector<16x1xf32>,
      %c0_20 = arith.constant 0 : index
      %c0_21 = arith.constant 0 : index
      %17 = vector.load %arg11[%c0_20, %c0_21] : memref<1x128xf32, #tpu.memory_space<vmem>>, vector<1x128xf32>
      %cst_22 = arith.constant 1.000000e+00 : f32
      %18 = vector.broadcast %cst_22 : f32 to vector<1x128xf32>
      %19 = arith.divf %18, %17 : vector<1x128xf32>
      %c0_23 = arith.constant 0 : index
      %c0_24 = arith.constant 0 : index
      %20 = vector.load %arg11[%c0_23, %c0_24] : memref<1x128xf32, #tpu.memory_space<vmem>>, vector<1x128xf32>
      tpu.vector_store %arg11[%c0_23, %c0_24], %19 {strides = array<i32>} : memref<1x128xf32, #tpu.memory_space<vmem>>, vector<1x128xf32>,
      %cst_25 = arith.constant 0.000000e+00 : f32
      %21 = vector.broadcast %cst_25 : f32 to vector<1x1xf32>
      %cst_26 = arith.constant 0.000000e+00 : f32
      %22 = vector.broadcast %cst_26 : f32 to vector<1x1xf32>
      %c0_i32_27 = arith.constant 0 : i32
      %c2_i32_28 = arith.constant 2 : i32
      %23 = arith.addi %c0_i32_27, %c2_i32_28 : i32
      %c1_i32_29 = arith.constant 1 : i32
      %24:2 = scf.for %arg12 = %c0_i32_27 to %23 step %c1_i32_29 iter_args(%arg13 = %21, %arg14 = %22) -> (vector<1x1xf32>, vector<1x1xf32>)  : i32 {
        %c8_i32 = arith.constant 8 : i32
        %34 = arith.muli %arg12, %c8_i32 : i32
        %35 = tpu.assume_multiple %34, 8 : i32
        %36 = arith.index_cast %35 : i32 to index
        %c0_38 = arith.constant 0 : index
        %37 = vector.load %arg7[%36, %c0_38] : memref<16x128xf32, #tpu.memory_space<vmem>>, vector<8x128xf32>
        %38 = tpu.iota {dimensions = array<i32: 0>} : vector<8x1xi32>
        %39 = vector.broadcast %35 : i32 to vector<8x1xi32>
        %40 = arith.addi %39, %38 : vector<8x1xi32>
        %c10_i32 = arith.constant 10 : i32
        %41 = vector.broadcast %c10_i32 : i32 to vector<8x1xi32>
        %42 = arith.cmpi slt, %40, %41 : vector<8x1xi32>
        %43 = arith.index_cast %35 : i32 to index
        %c0_39 = arith.constant 0 : index
        %44 = vector.load %arg8[%43, %c0_39] : memref<16x1xf32, #tpu.memory_space<vmem>>, vector<8x1xf32>
        %45 = vector.broadcast %44 : vector<8x1xf32> to vector<8x128xf32>
        %46 = arith.subf %37, %45 : vector<8x128xf32>
        %47 = math.exp %46 : vector<8x128xf32>
        %cst_40 = arith.constant 0.000000e+00 : f32
        %48 = vector.shape_cast %6 : vector<1x128xi1> to vector<1x128xi1>
        %49 = vector.broadcast %48 : vector<1x128xi1> to vector<8x128xi1>
        %50 = vector.broadcast %cst_40 : f32 to vector<8x128xf32>
        %51 = arith.select %49, %47, %50 : vector<8x128xi1>, vector<8x128xf32>
        %52 = arith.index_cast %35 : i32 to index
        %c0_41 = arith.constant 0 : index
        %53 = vector.load %arg9[%52, %c0_41] : memref<16x1xf32, #tpu.memory_space<vmem>>, vector<8x1xf32>
        %54 = vector.broadcast %53 : vector<8x1xf32> to vector<8x128xf32>
        %55 = arith.mulf %51, %54 : vector<8x128xf32>
        %c0_42 = arith.constant 0 : index
        %c0_43 = arith.constant 0 : index
        %56 = vector.load %arg10[%c0_42, %c0_43] : memref<1x128xf32, #tpu.memory_space<vmem>>, vector<1x128xf32>
        %57 = vector.broadcast %56 : vector<1x128xf32> to vector<8x128xf32>
        %58 = arith.subf %37, %57 : vector<8x128xf32>
        %59 = math.exp %58 : vector<8x128xf32>
        %cst_44 = arith.constant 0.000000e+00 : f32
        %60 = vector.shape_cast %42 : vector<8x1xi1> to vector<8x1xi1>
        %61 = vector.broadcast %60 : vector<8x1xi1> to vector<8x128xi1>
        %62 = vector.broadcast %cst_44 : f32 to vector<8x128xf32>
        %63 = arith.select %61, %59, %62 : vector<8x128xi1>, vector<8x128xf32>
        %c0_45 = arith.constant 0 : index
        %c0_46 = arith.constant 0 : index
        %64 = vector.load %arg11[%c0_45, %c0_46] : memref<1x128xf32, #tpu.memory_space<vmem>>, vector<1x128xf32>
        %65 = vector.broadcast %64 : vector<1x128xf32> to vector<8x128xf32>
        %66 = arith.mulf %63, %65 : vector<8x128xf32>
        %67 = arith.addf %55, %66 : vector<8x128xf32>
        %68 = arith.mulf %55, %66 : vector<8x128xf32>
        %69 = arith.subf %67, %68 : vector<8x128xf32>
        %70 = vector.broadcast %42 : vector<8x1xi1> to vector<8x128xi1>
        %71 = vector.broadcast %6 : vector<1x128xi1> to vector<8x128xi1>
        %72 = arith.andi %70, %71 : vector<8x128xi1>
        %cst_47 = arith.constant 0.000000e+00 : f32
        %73 = vector.broadcast %cst_47 : f32 to vector<8x128xf32>
        %74 = arith.select %72, %69, %73 : vector<8x128xi1>, vector<8x128xf32>
        %75 = arith.mulf %74, %37 : vector<8x128xf32>
        %cst_48 = arith.constant dense<0.000000e+00> : vector<8xf32>
        %76 = vector.multi_reduction <add>, %75, %cst_48 [1] : vector<8x128xf32> to vector<8xf32>
        %77 = vector.shape_cast %76 : vector<8xf32> to vector<8x1xf32>
        %cst_49 = arith.constant dense<0.000000e+00> : vector<1xf32>
        %78 = vector.multi_reduction <add>, %77, %cst_49 [0] : vector<8x1xf32> to vector<1xf32>
        %79 = vector.shape_cast %78 : vector<1xf32> to vector<1x1xf32>
        %80 = arith.addf %arg13, %79 : vector<1x1xf32>
        %cst_50 = arith.constant dense<0.000000e+00> : vector<8xf32>
        %81 = vector.multi_reduction <add>, %74, %cst_50 [1] : vector<8x128xf32> to vector<8xf32>
        %82 = vector.shape_cast %81 : vector<8xf32> to vector<8x1xf32>
        %cst_51 = arith.constant dense<0.000000e+00> : vector<1xf32>
        %83 = vector.multi_reduction <add>, %82, %cst_51 [0] : vector<8x1xf32> to vector<1xf32>
        %84 = vector.shape_cast %83 : vector<1xf32> to vector<1x1xf32>
        %85 = arith.addf %arg14, %84 : vector<1x1xf32>
        scf.yield %80, %85 : vector<1x1xf32>, vector<1x1xf32>
      }
      %c2_i32_30 = arith.constant 2 : i32
      %25 = arith.divf %24#0, %24#1 : vector<1x1xf32>
      %c0_31 = arith.constant 0 : index
      %c0_32 = arith.constant 0 : index
      %26 = vector.load %arg4[%c0_31, %c0_32] : memref<1x4xf32, #tpu.memory_space<vmem>>, vector<1x4xf32>
      %27 = vector.broadcast %25 : vector<1x1xf32> to vector<1x4xf32>
      %28 = arith.mulf %27, %26 : vector<1x4xf32>
      %c0_33 = arith.constant 0 : index
      %c0_34 = arith.constant 0 : index
      %29 = vector.load %arg5[%c0_33, %c0_34] : memref<1x4xf32, #tpu.memory_space<vmem>>, vector<1x4xf32>
      %30 = arith.addf %28, %29 : vector<1x4xf32>
      %c0_35 = arith.constant 0 : index
      %c0_36 = arith.constant 0 : index
      %c0_37 = arith.constant 0 : index
      %31 = vector.load %arg6[%c0_35, %c0_36, %c0_37] : memref<1x1x4xf32, #tpu.memory_space<vmem>>, vector<1x1x4xf32>
      %32 = vector.shape_cast %31 : vector<1x1x4xf32> to vector<1x4xf32>
      %33 = vector.shape_cast %30 : vector<1x4xf32> to vector<1x1x4xf32>
      tpu.vector_store %arg6[%c0_35, %c0_36, %c0_37], %33 {strides = array<i32>} : memref<1x1x4xf32, #tpu.memory_space<vmem>>, vector<1x1x4xf32>,
    } else {
    }
    return
  }
  func.func @transform_0(%arg0: i32, %arg1: i32) -> (i32, i32, i32) {
    %c0_i32 = arith.constant 0 : i32
    %c0_i32_0 = arith.constant 0 : i32
    return %arg0, %c0_i32, %arg1 : i32, i32, i32
  }
  func.func @transform_1(%arg0: i32, %arg1: i32) -> (i32, i32, i32) {
    %c0_i32 = arith.constant 0 : i32
    %c0_i32_0 = arith.constant 0 : i32
    return %arg0, %arg1, %c0_i32 : i32, i32, i32
  }
  func.func @transform_2(%arg0: i32, %arg1: i32) -> (i32, i32) {
    %c0_i32 = arith.constant 0 : i32
    %c0_i32_0 = arith.constant 0 : i32
    %c0_i32_1 = arith.constant 0 : i32
    return %c0_i32, %c0_i32_0 : i32, i32
  }
  func.func @transform_3(%arg0: i32, %arg1: i32) -> (i32, i32) {
    %c0_i32 = arith.constant 0 : i32
    %c0_i32_0 = arith.constant 0 : i32
    %c0_i32_1 = arith.constant 0 : i32
    return %c0_i32, %c0_i32_0 : i32, i32
  }
  func.func @transform_4(%arg0: i32, %arg1: i32) -> (i32, i32, i32) {
    %c0_i32 = arith.constant 0 : i32
    %c0_i32_0 = arith.constant 0 : i32
    %c0_i32_1 = arith.constant 0 : i32
    return %arg0, %c0_i32, %c0_i32_0 : i32, i32, i32
  }
}

</mosaic_0001>

<llo_original>
// kernel: tpu_custom_call.1
$region0: #{tpu_custom_call.1}
  #allocation0 [shape = 'u32[]', space=smem, size = 0x4, offset = 0x4, fixed_abs, tag = 'smem constant byte address 0x4 - core index']
  #allocation1 [shape = 'u32[144,128]{1,0:T(1,128)}', space=vmem, size = 0x12000, scoped, tag = 'internal scratch']
  #allocation2 [shape = 'f32[16,128]{1,0:T(8,128)}', space=vmem, size = 0x2000, scoped, tag = 'scratch operand']
  #allocation3 [shape = 'f32[16,1]{1,0:T(8,128)}', space=vmem, size = 0x2000, scoped, tag = 'scratch operand']
  #allocation4 [shape = 'f32[16,1]{1,0:T(8,128)}', space=vmem, size = 0x2000, scoped, tag = 'scratch operand']
  #allocation5 [shape = 'f32[1,128]{1,0:T(1,128)}', space=vmem, size = 0x200, scoped, tag = 'scratch operand']
  #allocation6 [shape = 'f32[1,128]{1,0:T(1,128)}', space=vmem, size = 0x200, scoped, tag = 'scratch operand']
  %s0 = inlined_call_operand.hbm [shape: f32[2,16,40], index: 0, kind: input, shape index: {}]
  %s1 = inlined_call_operand.hbm [shape: f32[2,40,128], index: 1, kind: input, shape index: {}]
  %s2 = inlined_call_operand.vmem [shape: f32[1,4], index: 2, kind: input, shape index: {}]
  %s3 = inlined_call_operand.vmem [shape: f32[1,4], index: 3, kind: input, shape index: {}]
  %s4 = inlined_call_operand.hbm [shape: f32[2,1,4], index: 4, kind: output, shape index: {}]
  %s5 = sld [smem:[#allocation0]]
  $region89: #{tpu_custom_call.1} parent=0
    _
  %s7 = ssub.s32 1, %s5
  %s8 = scalar_select 0, %s7, %s5
  $region1: #{tpu_custom_call.1} parent=0
    #allocation7 [shape = 'u8[16384]{0}', space=vmem, size = 0x4000, scoped, tag = 'input window, operand 0']
    #allocation8 [shape = 's32[2]{0}', space=sflag, size = 0x8, scoped, tag = 'scoped memory for tpu_custom_call.1']
    #allocation9 [shape = 's32[2]{0}', space=sflag, size = 0x8, scoped, tag = 'scoped memory for tpu_custom_call.1']
    #allocation10 [shape = 'u8[40960]{0}', space=vmem, size = 0xa000, scoped, tag = 'input window, operand 1']
    #allocation11 [shape = 's32[2]{0}', space=sflag, size = 0x8, scoped, tag = 'scoped memory for tpu_custom_call.1']
    #allocation12 [shape = 'u8[1024]{0}', space=vmem, size = 0x400, scoped, tag = 'output window, operand 0']
    %9 = vsyncpa [#allocation8], 0
    %s10 = scalar_lea.sflag [#allocation8], 1
    %11 = vsyncpa %s10, 0
    %12 = vsyncpa [#allocation11], 0
    %s13 = scalar_lea.sflag [#allocation11], 1
    %14 = vsyncpa %s13, 0
    %15 = vsyncpa [#allocation9], 0
    %s16 = scalar_lea.sflag [#allocation9], 1
    %17 = vsyncpa %s16, 0
    loop: start=0, step=1, limit=4
    $region2: #{tpu_custom_call.1} parent=1 // loop_pre_header
      _
    $region3: #{tpu_custom_call.1} parent=1 // loop_header
      %s19 = sphi 0, %s23
      %p20 = scmp.ge.s32.totalorder %s19, 4
      %s26 = sphi 0, %s38
      %s27 = sphi 0, %s34
      %s28 = sphi 0, %s26
      %s29 = sphi 0, %s27
      %s30 = sphi 0, %s28
      %s31 = sphi 0, %s29
      %s43 = sphi 0, %s45
      %s46 = sphi 0, %s43
      %s47 = sphi 0, %s46
      %s63 = sphi 0, %s47
      %s71 = sphi 0, %s73
      %s74 = sphi 0, %s71
      %s75 = sphi 0, %s74
      %s91 = sphi 0, %s75
      %s95 = sphi 0, %s95
      %s97 = sphi 0, %s95
      %s98 = sphi 0, %s97
      %s112 = sphi 0, %s98
      %s116 = sphi 0, %s116
      %s118 = sphi 0, %s116
      %s119 = sphi 0, %s118
      %s133 = sphi 0, %s119
      %s139 = sphi 0, %s141
      %s142 = sphi 0, %s139
      %s143 = sphi 0, %s142
      %s159 = sphi 0, %s143
    $region4: #{tpu_custom_call.1} parent=1 // loop_header_branch
      %22 = sbr.rel (%p20) target = $region8
    $region5: #{tpu_custom_call.1} parent=1 // loop_body
      %s24 = ssub.s32 %s19, 1
      %s25 = ssub.s32 %s19, 2
      %s32 = sadd.s32 1, %s27
      %p33 = scmp.ge.s32.totalorder %s32, 1
      %s34 = scalar_select %p33, 0, %s32
      %s35 = sadd.s32 1, %s26
      %s36 = scalar_select %p33, %s35, %s26
      %p37 = scmp.ge.s32.totalorder %s36, 2
      %s38 = scalar_select %p37, 0, %s36
      %s39 = ssub.s32 %s26, %s38
      %s40 = ssub.s32 %s27, %s34
      %s41 = sor.u32 %s39, %s40
      %p42 = scmp.eq.s32.totalorder %s41, 0
      %s44 = sadd.s32 %s43, 1
      %s45 = scalar_select %p42, %s43, %s44
      %p48 = pneg %p42
      %p49 = scmp.eq.s32.totalorder %s19, 1
      %p50 = por %p48, %p49
      %p51 = scmp.ne.s32.totalorder %s43, %s46
      %p52 = scmp.eq.s32.totalorder %s19, 0
      %p53 = por %p51, %p52
      %p54 = scmp.ne.s32.totalorder %s43, %s46
      %p55 = scmp.eq.s32.totalorder %s24, 1
      %p56 = por %p54, %p55
      %p57 = scmp.ne.s32.totalorder %s46, %s47
      %p58 = scmp.eq.s32.totalorder %s24, 0
      %p59 = por %p57, %p58
      %p60 = scmp.ne.s32.totalorder %s46, %s47
      %p61 = scmp.eq.s32.totalorder %s25, 1
      %p62 = por %p60, %p61
      %p64 = scmp.ne.s32.totalorder %s47, %s63
      %p65 = scmp.eq.s32.totalorder %s25, 0
      %p66 = por %p64, %p65
      %s67 = ssub.s32 %s26, %s38
      %s68 = ssub.s32 %s27, %s34
      %s69 = sor.u32 %s67, %s68
      %p70 = scmp.eq.s32.totalorder %s69, 0
      %s72 = sadd.s32 %s71, 1
      %s73 = scalar_select %p70, %s71, %s72
      %p76 = pneg %p70
      %p77 = scmp.eq.s32.totalorder %s19, 1
      %p78 = por %p76, %p77
      %p79 = scmp.ne.s32.totalorder %s71, %s74
      %p80 = scmp.eq.s32.totalorder %s19, 0
      %p81 = por %p79, %p80
      %p82 = scmp.ne.s32.totalorder %s71, %s74
      %p83 = scmp.eq.s32.totalorder %s24, 1
      %p84 = por %p82, %p83
      %p85 = scmp.ne.s32.totalorder %s74, %s75
      %p86 = scmp.eq.s32.totalorder %s24, 0
      %p87 = por %p85, %p86
      %p88 = scmp.ne.s32.totalorder %s74, %s75
      %p89 = scmp.eq.s32.totalorder %s25, 1
      %p90 = por %p88, %p89
      %p92 = scmp.ne.s32.totalorder %s75, %s91
      %p93 = scmp.eq.s32.totalorder %s25, 0
      %p94 = por %p92, %p93
      %s96 = sadd.s32 %s95, 1
      %p99 = scmp.eq.s32.totalorder %s19, 1
      %p100 = scmp.ne.s32.totalorder %s95, %s97
      %p101 = scmp.eq.s32.totalorder %s19, 0
      %p102 = por %p100, %p101
      %p103 = scmp.ne.s32.totalorder %s95, %s97
      %p104 = scmp.eq.s32.totalorder %s24, 1
      %p105 = por %p103, %p104
      %p106 = scmp.ne.s32.totalorder %s97, %s98
      %p107 = scmp.eq.s32.totalorder %s24, 0
      %p108 = por %p106, %p107
      %p109 = scmp.ne.s32.totalorder %s97, %s98
      %p110 = scmp.eq.s32.totalorder %s25, 1
      %p111 = por %p109, %p110
      %p113 = scmp.ne.s32.totalorder %s98, %s112
      %p114 = scmp.eq.s32.totalorder %s25, 0
      %p115 = por %p113, %p114
      %s117 = sadd.s32 %s116, 1
      %p120 = scmp.eq.s32.totalorder %s19, 1
      %p121 = scmp.ne.s32.totalorder %s116, %s118
      %p122 = scmp.eq.s32.totalorder %s19, 0
      %p123 = por %p121, %p122
      %p124 = scmp.ne.s32.totalorder %s116, %s118
      %p125 = scmp.eq.s32.totalorder %s24, 1
      %p126 = por %p124, %p125
      %p127 = scmp.ne.s32.totalorder %s118, %s119
      %p128 = scmp.eq.s32.totalorder %s24, 0
      %p129 = por %p127, %p128
      %p130 = scmp.ne.s32.totalorder %s118, %s119
      %p131 = scmp.eq.s32.totalorder %s25, 1
      %p132 = por %p130, %p131
      %p134 = scmp.ne.s32.totalorder %s119, %s133
      %p135 = scmp.eq.s32.totalorder %s25, 0
      %p136 = por %p134, %p135
      %s137 = ssub.s32 %s26, %s38
      %p138 = scmp.eq.s32.totalorder %s137, 0
      %s140 = sadd.s32 %s139, 1
      %s141 = scalar_select %p138, %s139, %s140
      %p144 = pneg %p138
      %p145 = scmp.eq.s32.totalorder %s19, 1
      %p146 = por %p144, %p145
      %p147 = scmp.ne.s32.totalorder %s139, %s142
      %p148 = scmp.eq.s32.totalorder %s19, 0
      %p149 = por %p147, %p148
      %p150 = scmp.ne.s32.totalorder %s139, %s142
      %p151 = scmp.eq.s32.totalorder %s24, 1
      %p152 = por %p150, %p151
      %p153 = scmp.ne.s32.totalorder %s142, %s143
      %p154 = scmp.eq.s32.totalorder %s24, 0
      %p155 = por %p153, %p154
      %p156 = scmp.ne.s32.totalorder %s142, %s143
      %p157 = scmp.eq.s32.totalorder %s25, 1
      %p158 = por %p156, %p157
      %p160 = scmp.ne.s32.totalorder %s143, %s159
      %p161 = scmp.eq.s32.totalorder %s25, 0
      %p162 = por %p160, %p161
      %p163 = scmp.le.s32.totalorder 1, %s19
      %p164 = scmp.lt.s32.totalorder %s19, 3
      %p165 = pnand %p163, %p164
      %p166 = pneg %p165
      // Predicated region
      $region9: #{tpu_custom_call.1} parent=5 // pred_check
        _
      $region10: #{tpu_custom_call.1} parent=5 // pred_check_branch
        %168 = sbr.rel (%p165) target = $region12
      $region11: #{tpu_custom_call.1} parent=5 // pred_region
        %s169 = ssub.s32 %s19, 1
        // Predicated region
        $region13: #{tpu_custom_call.1} parent=11 // pred_check
          %p170 = pneg %p108
        $region14: #{tpu_custom_call.1} parent=11 // pred_check_branch
          %172 = sbr.rel (%p170) target = $region16
        $region15: #{tpu_custom_call.1} parent=11 // pred_region
          _
        $region16: #{tpu_custom_call.1} parent=11 // pred_fallthru
          _
        // Predicated region
        $region17: #{tpu_custom_call.1} parent=11 // pred_check
          %p173 = pneg %p129
        $region18: #{tpu_custom_call.1} parent=11 // pred_check_branch
          %175 = sbr.rel (%p173) target = $region20
        $region19: #{tpu_custom_call.1} parent=11 // pred_region
          _
        $region20: #{tpu_custom_call.1} parent=11 // pred_fallthru
          _
      $region12: #{tpu_custom_call.1} parent=5 // pred_fallthru
        _
      %p176 = scmp.lt.s32.totalorder %s19, 2
      // Predicated region
      $region21: #{tpu_custom_call.1} parent=5 // pred_check
        %p177 = pneg %p176
      $region22: #{tpu_custom_call.1} parent=5 // pred_check_branch
        %179 = sbr.rel (%p177) target = $region24
      $region23: #{tpu_custom_call.1} parent=5 // pred_region
        // Predicated region
        $region25: #{tpu_custom_call.1} parent=23 // pred_check
          %p180 = pneg %p53
        $region26: #{tpu_custom_call.1} parent=23 // pred_check_branch
          %182 = sbr.rel (%p180) target = $region28
        $region27: #{tpu_custom_call.1} parent=23 // pred_region
          %s183 = sand.u32 %s43, 1
          %s184 = scalar_lea.sflag [#allocation8], %s183
          %s185 = sand.u32 %s43, 1
          %s186 = smul.addr %s185, 16
          %s187 = scalar_lea.vmem [#allocation7], %s186
          %s189 = ssub.s32 256, 256
          %190 = vsyncadd %s184, %s189
          %s191 = smul.addr %s26, 2
          %s192 = sadd.s32 %s27, %s191
          %s193 = smul.addr %s192, 128
          %s194 = scalar_lea.hbm %s0, %s193
          %s195 = sshll.u32 %s187, 4
          %s196 = int_to_ptr.vmem [resolvable:$true] %s195
          %201 = dma.hbm_to_vmem [thread:$0]  %s194, 256, %s196, %s184, 128, 128, 8
        $region28: #{tpu_custom_call.1} parent=23 // pred_fallthru
          _
        // Predicated region
        $region29: #{tpu_custom_call.1} parent=23 // pred_check
          %p202 = pneg %p81
        $region30: #{tpu_custom_call.1} parent=23 // pred_check_branch
          %204 = sbr.rel (%p202) target = $region32
        $region31: #{tpu_custom_call.1} parent=23 // pred_region
          %s205 = sand.u32 %s71, 1
          %s206 = scalar_lea.sflag [#allocation11], %s205
          %s207 = sand.u32 %s71, 1
          %s208 = smul.addr %s207, 40
          %s209 = scalar_lea.vmem [#allocation10], %s208
          %s210 = smul.u32 5, %s27
          %s212 = ssub.s32 640, 640
          %213 = vsyncadd %s206, %s212
          %s214 = smul.addr %s26, 5
          %s215 = sadd.s32 %s210, %s214
          %s216 = smul.addr %s215, 128
          %s217 = scalar_lea.hbm %s1, %s216
          %s218 = sshll.u32 %s209, 4
          %s219 = int_to_ptr.vmem [resolvable:$true] %s218
          %224 = dma.hbm_to_vmem [thread:$0]  %s217, 640, %s219, %s206, 128, 128, 8
        $region32: #{tpu_custom_call.1} parent=23 // pred_fallthru
          _
      $region24: #{tpu_custom_call.1} parent=5 // pred_fallthru
        _
      %p225 = scmp.le.s32.totalorder 1, %s19
      %p226 = scmp.lt.s32.totalorder %s19, 3
      %p227 = pnand %p225, %p226
      %p228 = pneg %p227
      // Predicated region
      $region33: #{tpu_custom_call.1} parent=5 // pred_check
        _
      $region34: #{tpu_custom_call.1} parent=5 // pred_check_branch
        %230 = sbr.rel (%p227) target = $region36
      $region35: #{tpu_custom_call.1} parent=5 // pred_region
        %s231 = ssub.s32 %s19, 1
        %s232 = sand.u32 %s46, 1
        %s233 = scalar_lea.sflag [#allocation8], %s232
        %s234 = sand.u32 %s46, 1
        %s235 = smul.addr %s234, 16
        %s236 = scalar_lea.vmem [#allocation7], %s235
        // Predicated region
        $region37: #{tpu_custom_call.1} parent=35 // pred_check
          %p237 = pneg %p59
        $region38: #{tpu_custom_call.1} parent=35 // pred_check_branch
          %239 = sbr.rel (%p237) target = $region40
        $region39: #{tpu_custom_call.1} parent=35 // pred_region
          %240 = dma.done %s233, 256
        $region40: #{tpu_custom_call.1} parent=35 // pred_fallthru
          _
        %s241 = sand.u32 %s74, 1
        %s242 = scalar_lea.sflag [#allocation11], %s241
        %s243 = sand.u32 %s74, 1
        %s244 = smul.addr %s243, 40
        %s245 = scalar_lea.vmem [#allocation10], %s244
        // Predicated region
        $region41: #{tpu_custom_call.1} parent=35 // pred_check
          %p246 = pneg %p87
        $region42: #{tpu_custom_call.1} parent=35 // pred_check_branch
          %248 = sbr.rel (%p246) target = $region44
        $region43: #{tpu_custom_call.1} parent=35 // pred_region
          %249 = dma.done %s242, 640
        $region44: #{tpu_custom_call.1} parent=35 // pred_fallthru
          _
        %s250 = sand.u32 %s46, 1
        %s251 = scalar_lea.sflag [#allocation8], %s250
        %s252 = sand.u32 %s46, 1
        %s253 = smul.addr %s252, 16
        %s254 = scalar_lea.vmem [#allocation7], %s253
        %p255 = pneg %p59
        %p256 = pneg %p56
        %s257 = sand.u32 %s74, 1
        %s258 = scalar_lea.sflag [#allocation11], %s257
        %s259 = sand.u32 %s74, 1
        %s260 = smul.addr %s259, 40
        %s261 = scalar_lea.vmem [#allocation10], %s260
        %p262 = pneg %p87
        %p263 = pneg %p84
        %p264 = pneg %p108
        %p265 = pneg %p105
        %p266 = pneg %p129
        %p267 = pneg %p126
        %p268 = pneg %p155
        %p269 = pneg %p152
        %s270 = sand.u32 %s142, 1
        %s271 = scalar_lea.sflag [#allocation9], %s270
        %s272 = sand.u32 %s142, 1
        %s273 = scalar_lea.vmem [#allocation12], %s272
        %s274 = smul.u32 5, %s29
        loop: start=0, step=1, limit=2
        $region45: #{tpu_custom_call.1} parent=35 // loop_pre_header
          _
        $region46: #{tpu_custom_call.1} parent=35 // loop_header
          %s276 = sphi 0, %s280
          %p277 = scmp.ge.s32.totalorder %s276, 2
        $region47: #{tpu_custom_call.1} parent=35 // loop_header_branch
          %279 = sbr.rel (%p277) target = $region51
        $region48: #{tpu_custom_call.1} parent=35 // loop_body
          %s281 = smul.u32 %s276, 8
          %s282 = scalar_lea.vmem %s236, %s281 [#allocation7]
          %v283 = vld [vmem:[%s282] sm:$0xff]
          %v284 = vld [vmem:[%s245] sm:$0x1]
          %286 = vset.pattern.permute.xlu0 0
          %287 = vperm.xlu0 %286, %v283
          %v288 = vpop.permute.xlu0 %287
          %v290 = vlaneseq
          %v291 = vshrl.u32 %v290, 7
          %v292 = vsub.s32 0, %v291
          %v293 = vrot.slane %v284, %v292
          %v294 = vsub.f32 %v288, %v293
          %v295 = vand.u32 2147483647, %v294
          %v296 = vadd.f32 %v295, 0.0
          %v297 = vld [vmem:[%s245 + $0x1] sm:$0x1]
          %298 = vset.pattern.permute.xlu0 1
          %299 = vperm.xlu0 %298, %v283
          %v300 = vpop.permute.xlu0 %299
          %v302 = vlaneseq
          %v303 = vshrl.u32 %v302, 7
          %v304 = vsub.s32 0, %v303
          %v305 = vrot.slane %v297, %v304
          %v306 = vsub.f32 %v300, %v305
          %v307 = vand.u32 2147483647, %v306
          %v308 = vadd.f32 %v307, 0.0
          %v309 = vld [vmem:[%s245 + $0x2] sm:$0x1]
          %310 = vset.pattern.permute.xlu0 2
          %311 = vperm.xlu0 %310, %v283
          %v312 = vpop.permute.xlu0 %311
          %v314 = vlaneseq
          %v315 = vshrl.u32 %v314, 7
          %v316 = vsub.s32 0, %v315
          %v317 = vrot.slane %v309, %v316
          %v318 = vsub.f32 %v312, %v317
          %v319 = vand.u32 2147483647, %v318
          %v320 = vadd.f32 %v319, 0.0
          %v321 = vld [vmem:[%s245 + $0x3] sm:$0x1]
          %322 = vset.pattern.permute.xlu0 3
          %323 = vperm.xlu0 %322, %v283
          %v324 = vpop.permute.xlu0 %323
          %v326 = vlaneseq
          %v327 = vshrl.u32 %v326, 7
          %v328 = vsub.s32 0, %v327
          %v329 = vrot.slane %v321, %v328
          %v330 = vsub.f32 %v324, %v329
          %v331 = vand.u32 2147483647, %v330
          %v332 = vadd.f32 %v331, 0.0
          %v333 = vld [vmem:[%s245 + $0x4] sm:$0x1]
          %334 = vset.pattern.permute.xlu0 4
          %335 = vperm.xlu0 %334, %v283
          %v336 = vpop.permute.xlu0 %335
          %v338 = vlaneseq
          %v339 = vshrl.u32 %v338, 7
          %v340 = vsub.s32 0, %v339
          %v341 = vrot.slane %v333, %v340
          %v342 = vsub.f32 %v336, %v341
          %v343 = vand.u32 2147483647, %v342
          %v344 = vadd.f32 %v296, %v343
          %v345 = vld [vmem:[%s245 + $0x5] sm:$0x1]
          %346 = vset.pattern.permute.xlu0 5
          %347 = vperm.xlu0 %346, %v283
          %v348 = vpop.permute.xlu0 %347
          %v350 = vlaneseq
          %v351 = vshrl.u32 %v350, 7
          %v352 = vsub.s32 0, %v351
          %v353 = vrot.slane %v345, %v352
          %v354 = vsub.f32 %v348, %v353
          %v355 = vand.u32 2147483647, %v354
          %v356 = vadd.f32 %v308, %v355
          %v357 = vld [vmem:[%s245 + $0x6] sm:$0x1]
          %358 = vset.pattern.permute.xlu0 6
          %359 = vperm.xlu0 %358, %v283
          %v360 = vpop.permute.xlu0 %359
          %v362 = vlaneseq
          %v363 = vshrl.u32 %v362, 7
          %v364 = vsub.s32 0, %v363
          %v365 = vrot.slane %v357, %v364
          %v366 = vsub.f32 %v360, %v365
          %v367 = vand.u32 2147483647, %v366
          %v368 = vadd.f32 %v320, %v367
          %v369 = vld [vmem:[%s245 + $0x7] sm:$0x1]
          %370 = vset.pattern.permute.xlu0 7
          %371 = vperm.xlu0 %370, %v283
          %v372 = vpop.permute.xlu0 %371
          %v374 = vlaneseq
          %v375 = vshrl.u32 %v374, 7
          %v376 = vsub.s32 0, %v375
          %v377 = vrot.slane %v369, %v376
          %v378 = vsub.f32 %v372, %v377
          %v379 = vand.u32 2147483647, %v378
          %v380 = vadd.f32 %v332, %v379
          %v381 = vld [vmem:[%s245 + $0x8] sm:$0x1]
          %382 = vset.pattern.permute.xlu0 8
          %383 = vperm.xlu0 %382, %v283
          %v384 = vpop.permute.xlu0 %383
          %v386 = vlaneseq
          %v387 = vshrl.u32 %v386, 7
          %v388 = vsub.s32 0, %v387
          %v389 = vrot.slane %v381, %v388
          %v390 = vsub.f32 %v384, %v389
          %v391 = vand.u32 2147483647, %v390
          %v392 = vadd.f32 %v344, %v391
          %v393 = vld [vmem:[%s245 + $0x9] sm:$0x1]
          %394 = vset.pattern.permute.xlu0 9
          %395 = vperm.xlu0 %394, %v283
          %v396 = vpop.permute.xlu0 %395
          %v398 = vlaneseq
          %v399 = vshrl.u32 %v398, 7
          %v400 = vsub.s32 0, %v399
          %v401 = vrot.slane %v393, %v400
          %v402 = vsub.f32 %v396, %v401
          %v403 = vand.u32 2147483647, %v402
          %v404 = vadd.f32 %v356, %v403
          %v405 = vld [vmem:[%s245 + $0xa] sm:$0x1]
          %406 = vset.pattern.permute.xlu0 10
          %407 = vperm.xlu0 %406, %v283
          %v408 = vpop.permute.xlu0 %407
          %v410 = vlaneseq
          %v411 = vshrl.u32 %v410, 7
          %v412 = vsub.s32 0, %v411
          %v413 = vrot.slane %v405, %v412
          %v414 = vsub.f32 %v408, %v413
          %v415 = vand.u32 2147483647, %v414
          %v416 = vadd.f32 %v368, %v415
          %v417 = vld [vmem:[%s245 + $0xb] sm:$0x1]
          %418 = vset.pattern.permute.xlu0 11
          %419 = vperm.xlu0 %418, %v283
          %v420 = vpop.permute.xlu0 %419
          %v422 = vlaneseq
          %v423 = vshrl.u32 %v422, 7
          %v424 = vsub.s32 0, %v423
          %v425 = vrot.slane %v417, %v424
          %v426 = vsub.f32 %v420, %v425
          %v427 = vand.u32 2147483647, %v426
          %v428 = vadd.f32 %v380, %v427
          %v429 = vld [vmem:[%s245 + $0xc] sm:$0x1]
          %430 = vset.pattern.permute.xlu0 12
          %431 = vperm.xlu0 %430, %v283
          %v432 = vpop.permute.xlu0 %431
          %v434 = vlaneseq
          %v435 = vshrl.u32 %v434, 7
          %v436 = vsub.s32 0, %v435
          %v437 = vrot.slane %v429, %v436
          %v438 = vsub.f32 %v432, %v437
          %v439 = vand.u32 2147483647, %v438
          %v440 = vadd.f32 %v392, %v439
          %v441 = vld [vmem:[%s245 + $0xd] sm:$0x1]
          %442 = vset.pattern.permute.xlu0 13
          %443 = vperm.xlu0 %442, %v283
          %v444 = vpop.permute.xlu0 %443
          %v446 = vlaneseq
          %v447 = vshrl.u32 %v446, 7
          %v448 = vsub.s32 0, %v447
          %v449 = vrot.slane %v441, %v448
          %v450 = vsub.f32 %v444, %v449
          %v451 = vand.u32 2147483647, %v450
          %v452 = vadd.f32 %v404, %v451
          %v453 = vld [vmem:[%s245 + $0xe] sm:$0x1]
          %454 = vset.pattern.permute.xlu0 14
          %455 = vperm.xlu0 %454, %v283
          %v456 = vpop.permute.xlu0 %455
          %v458 = vlaneseq
          %v459 = vshrl.u32 %v458, 7
          %v460 = vsub.s32 0, %v459
          %v461 = vrot.slane %v453, %v460
          %v462 = vsub.f32 %v456, %v461
          %v463 = vand.u32 2147483647, %v462
          %v464 = vadd.f32 %v416, %v463
          %v465 = vld [vmem:[%s245 + $0xf] sm:$0x1]
          %466 = vset.pattern.permute.xlu0 15
          %467 = vperm.xlu0 %466, %v283
          %v468 = vpop.permute.xlu0 %467
          %v470 = vlaneseq
          %v471 = vshrl.u32 %v470, 7
          %v472 = vsub.s32 0, %v471
          %v473 = vrot.slane %v465, %v472
          %v474 = vsub.f32 %v468, %v473
          %v475 = vand.u32 2147483647, %v474
          %v476 = vadd.f32 %v428, %v475
          %v477 = vld [vmem:[%s245 + $0x10] sm:$0x1]
          %478 = vset.pattern.permute.xlu0 16
          %479 = vperm.xlu0 %478, %v283
          %v480 = vpop.permute.xlu0 %479
          %v482 = vlaneseq
          %v483 = vshrl.u32 %v482, 7
          %v484 = vsub.s32 0, %v483
          %v485 = vrot.slane %v477, %v484
          %v486 = vsub.f32 %v480, %v485
          %v487 = vand.u32 2147483647, %v486
          %v488 = vadd.f32 %v440, %v487
          %v489 = vld [vmem:[%s245 + $0x11] sm:$0x1]
          %490 = vset.pattern.permute.xlu0 17
          %491 = vperm.xlu0 %490, %v283
          %v492 = vpop.permute.xlu0 %491
          %v494 = vlaneseq
          %v495 = vshrl.u32 %v494, 7
          %v496 = vsub.s32 0, %v495
          %v497 = vrot.slane %v489, %v496
          %v498 = vsub.f32 %v492, %v497
          %v499 = vand.u32 2147483647, %v498
          %v500 = vadd.f32 %v452, %v499
          %v501 = vld [vmem:[%s245 + $0x12] sm:$0x1]
          %502 = vset.pattern.permute.xlu0 18
          %503 = vperm.xlu0 %502, %v283
          %v504 = vpop.permute.xlu0 %503
          %v506 = vlaneseq
          %v507 = vshrl.u32 %v506, 7
          %v508 = vsub.s32 0, %v507
          %v509 = vrot.slane %v501, %v508
          %v510 = vsub.f32 %v504, %v509
          %v511 = vand.u32 2147483647, %v510
          %v512 = vadd.f32 %v464, %v511
          %v513 = vld [vmem:[%s245 + $0x13] sm:$0x1]
          %514 = vset.pattern.permute.xlu0 19
          %515 = vperm.xlu0 %514, %v283
          %v516 = vpop.permute.xlu0 %515
          %v518 = vlaneseq
          %v519 = vshrl.u32 %v518, 7
          %v520 = vsub.s32 0, %v519
          %v521 = vrot.slane %v513, %v520
          %v522 = vsub.f32 %v516, %v521
          %v523 = vand.u32 2147483647, %v522
          %v524 = vadd.f32 %v476, %v523
          %v525 = vld [vmem:[%s245 + $0x14] sm:$0x1]
          %526 = vset.pattern.permute.xlu0 20
          %527 = vperm.xlu0 %526, %v283
          %v528 = vpop.permute.xlu0 %527
          %v530 = vlaneseq
          %v531 = vshrl.u32 %v530, 7
          %v532 = vsub.s32 0, %v531
          %v533 = vrot.slane %v525, %v532
          %v534 = vsub.f32 %v528, %v533
          %v535 = vand.u32 2147483647, %v534
          %v536 = vadd.f32 %v488, %v535
          %v537 = vld [vmem:[%s245 + $0x15] sm:$0x1]
          %538 = vset.pattern.permute.xlu0 21
          %539 = vperm.xlu0 %538, %v283
          %v540 = vpop.permute.xlu0 %539
          %v542 = vlaneseq
          %v543 = vshrl.u32 %v542, 7
          %v544 = vsub.s32 0, %v543
          %v545 = vrot.slane %v537, %v544
          %v546 = vsub.f32 %v540, %v545
          %v547 = vand.u32 2147483647, %v546
          %v548 = vadd.f32 %v500, %v547
          %v549 = vld [vmem:[%s245 + $0x16] sm:$0x1]
          %550 = vset.pattern.permute.xlu0 22
          %551 = vperm.xlu0 %550, %v283
          %v552 = vpop.permute.xlu0 %551
          %v554 = vlaneseq
          %v555 = vshrl.u32 %v554, 7
          %v556 = vsub.s32 0, %v555
          %v557 = vrot.slane %v549, %v556
          %v558 = vsub.f32 %v552, %v557
          %v559 = vand.u32 2147483647, %v558
          %v560 = vadd.f32 %v512, %v559
          %v561 = vld [vmem:[%s245 + $0x17] sm:$0x1]
          %562 = vset.pattern.permute.xlu0 23
          %563 = vperm.xlu0 %562, %v283
          %v564 = vpop.permute.xlu0 %563
          %v566 = vlaneseq
          %v567 = vshrl.u32 %v566, 7
          %v568 = vsub.s32 0, %v567
          %v569 = vrot.slane %v561, %v568
          %v570 = vsub.f32 %v564, %v569
          %v571 = vand.u32 2147483647, %v570
          %v572 = vadd.f32 %v524, %v571
          %v573 = vld [vmem:[%s245 + $0x18] sm:$0x1]
          %574 = vset.pattern.permute.xlu0 24
          %575 = vperm.xlu0 %574, %v283
          %v576 = vpop.permute.xlu0 %575
          %v578 = vlaneseq
          %v579 = vshrl.u32 %v578, 7
          %v580 = vsub.s32 0, %v579
          %v581 = vrot.slane %v573, %v580
          %v582 = vsub.f32 %v576, %v581
          %v583 = vand.u32 2147483647, %v582
          %v584 = vadd.f32 %v536, %v583
          %v585 = vld [vmem:[%s245 + $0x19] sm:$0x1]
          %586 = vset.pattern.permute.xlu0 25
          %587 = vperm.xlu0 %586, %v283
          %v588 = vpop.permute.xlu0 %587
          %v590 = vlaneseq
          %v591 = vshrl.u32 %v590, 7
          %v592 = vsub.s32 0, %v591
          %v593 = vrot.slane %v585, %v592
          %v594 = vsub.f32 %v588, %v593
          %v595 = vand.u32 2147483647, %v594
          %v596 = vadd.f32 %v548, %v595
          %v597 = vld [vmem:[%s245 + $0x1a] sm:$0x1]
          %598 = vset.pattern.permute.xlu0 26
          %599 = vperm.xlu0 %598, %v283
          %v600 = vpop.permute.xlu0 %599
          %v602 = vlaneseq
          %v603 = vshrl.u32 %v602, 7
          %v604 = vsub.s32 0, %v603
          %v605 = vrot.slane %v597, %v604
          %v606 = vsub.f32 %v600, %v605
          %v607 = vand.u32 2147483647, %v606
          %v608 = vadd.f32 %v560, %v607
          %v609 = vld [vmem:[%s245 + $0x1b] sm:$0x1]
          %610 = vset.pattern.permute.xlu0 27
          %611 = vperm.xlu0 %610, %v283
          %v612 = vpop.permute.xlu0 %611
          %v614 = vlaneseq
          %v615 = vshrl.u32 %v614, 7
          %v616 = vsub.s32 0, %v615
          %v617 = vrot.slane %v609, %v616
          %v618 = vsub.f32 %v612, %v617
          %v619 = vand.u32 2147483647, %v618
          %v620 = vadd.f32 %v572, %v619
          %v621 = vld [vmem:[%s245 + $0x1c] sm:$0x1]
          %622 = vset.pattern.permute.xlu0 28
          %623 = vperm.xlu0 %622, %v283
          %v624 = vpop.permute.xlu0 %623
          %v626 = vlaneseq
          %v627 = vshrl.u32 %v626, 7
          %v628 = vsub.s32 0, %v627
          %v629 = vrot.slane %v621, %v628
          %v630 = vsub.f32 %v624, %v629
          %v631 = vand.u32 2147483647, %v630
          %v632 = vadd.f32 %v584, %v631
          %v633 = vld [vmem:[%s245 + $0x1d] sm:$0x1]
          %634 = vset.pattern.permute.xlu0 29
          %635 = vperm.xlu0 %634, %v283
          %v636 = vpop.permute.xlu0 %635
          %v638 = vlaneseq
          %v639 = vshrl.u32 %v638, 7
          %v640 = vsub.s32 0, %v639
          %v641 = vrot.slane %v633, %v640
          %v642 = vsub.f32 %v636, %v641
          %v643 = vand.u32 2147483647, %v642
          %v644 = vadd.f32 %v596, %v643
          %v645 = vld [vmem:[%s245 + $0x1e] sm:$0x1]
          %646 = vset.pattern.permute.xlu0 30
          %647 = vperm.xlu0 %646, %v283
          %v648 = vpop.permute.xlu0 %647
          %v650 = vlaneseq
          %v651 = vshrl.u32 %v650, 7
          %v652 = vsub.s32 0, %v651
          %v653 = vrot.slane %v645, %v652
          %v654 = vsub.f32 %v648, %v653
          %v655 = vand.u32 2147483647, %v654
          %v656 = vadd.f32 %v608, %v655
          %v657 = vld [vmem:[%s245 + $0x1f] sm:$0x1]
          %658 = vset.pattern.permute.xlu0 31
          %659 = vperm.xlu0 %658, %v283
          %v660 = vpop.permute.xlu0 %659
          %v662 = vlaneseq
          %v663 = vshrl.u32 %v662, 7
          %v664 = vsub.s32 0, %v663
          %v665 = vrot.slane %v657, %v664
          %v666 = vsub.f32 %v660, %v665
          %v667 = vand.u32 2147483647, %v666
          %v668 = vadd.f32 %v620, %v667
          %v669 = vld [vmem:[%s245 + $0x20] sm:$0x1]
          %670 = vset.pattern.permute.xlu0 32
          %671 = vperm.xlu0 %670, %v283
          %v672 = vpop.permute.xlu0 %671
          %v674 = vlaneseq
          %v675 = vshrl.u32 %v674, 7
          %v676 = vsub.s32 0, %v675
          %v677 = vrot.slane %v669, %v676
          %v678 = vsub.f32 %v672, %v677
          %v679 = vand.u32 2147483647, %v678
          %v680 = vadd.f32 %v632, %v679
          %v681 = vld [vmem:[%s245 + $0x21] sm:$0x1]
          %682 = vset.pattern.permute.xlu0 33
          %683 = vperm.xlu0 %682, %v283
          %v684 = vpop.permute.xlu0 %683
          %v686 = vlaneseq
          %v687 = vshrl.u32 %v686, 7
          %v688 = vsub.s32 0, %v687
          %v689 = vrot.slane %v681, %v688
          %v690 = vsub.f32 %v684, %v689
          %v691 = vand.u32 2147483647, %v690
          %v692 = vadd.f32 %v644, %v691
          %v693 = vld [vmem:[%s245 + $0x22] sm:$0x1]
          %694 = vset.pattern.permute.xlu0 34
          %695 = vperm.xlu0 %694, %v283
          %v696 = vpop.permute.xlu0 %695
          %v698 = vlaneseq
          %v699 = vshrl.u32 %v698, 7
          %v700 = vsub.s32 0, %v699
          %v701 = vrot.slane %v693, %v700
          %v702 = vsub.f32 %v696, %v701
          %v703 = vand.u32 2147483647, %v702
          %v704 = vadd.f32 %v656, %v703
          %v705 = vld [vmem:[%s245 + $0x23] sm:$0x1]
          %706 = vset.pattern.permute.xlu0 35
          %707 = vperm.xlu0 %706, %v283
          %v708 = vpop.permute.xlu0 %707
          %v710 = vlaneseq
          %v711 = vshrl.u32 %v710, 7
          %v712 = vsub.s32 0, %v711
          %v713 = vrot.slane %v705, %v712
          %v714 = vsub.f32 %v708, %v713
          %v715 = vand.u32 2147483647, %v714
          %v716 = vadd.f32 %v668, %v715
          %v717 = vld [vmem:[%s245 + $0x24] sm:$0x1]
          %718 = vset.pattern.permute.xlu0 36
          %719 = vperm.xlu0 %718, %v283
          %v720 = vpop.permute.xlu0 %719
          %v722 = vlaneseq
          %v723 = vshrl.u32 %v722, 7
          %v724 = vsub.s32 0, %v723
          %v725 = vrot.slane %v717, %v724
          %v726 = vsub.f32 %v720, %v725
          %v727 = vand.u32 2147483647, %v726
          %v728 = vadd.f32 %v680, %v727
          %v729 = vld [vmem:[%s245 + $0x25] sm:$0x1]
          %730 = vset.pattern.permute.xlu0 37
          %731 = vperm.xlu0 %730, %v283
          %v732 = vpop.permute.xlu0 %731
          %v734 = vlaneseq
          %v735 = vshrl.u32 %v734, 7
          %v736 = vsub.s32 0, %v735
          %v737 = vrot.slane %v729, %v736
          %v738 = vsub.f32 %v732, %v737
          %v739 = vand.u32 2147483647, %v738
          %v740 = vadd.f32 %v692, %v739
          %v741 = vld [vmem:[%s245 + $0x26] sm:$0x1]
          %742 = vset.pattern.permute.xlu0 38
          %743 = vperm.xlu0 %742, %v283
          %v744 = vpop.permute.xlu0 %743
          %v746 = vlaneseq
          %v747 = vshrl.u32 %v746, 7
          %v748 = vsub.s32 0, %v747
          %v749 = vrot.slane %v741, %v748
          %v750 = vsub.f32 %v744, %v749
          %v751 = vand.u32 2147483647, %v750
          %v752 = vadd.f32 %v704, %v751
          %v753 = vld [vmem:[%s245 + $0x27] sm:$0x1]
          %754 = vset.pattern.permute.xlu0 39
          %755 = vperm.xlu0 %754, %v283
          %v756 = vpop.permute.xlu0 %755
          %v758 = vlaneseq
          %v759 = vshrl.u32 %v758, 7
          %v760 = vsub.s32 0, %v759
          %v761 = vrot.slane %v753, %v760
          %v762 = vsub.f32 %v756, %v761
          %v763 = vand.u32 2147483647, %v762
          %v764 = vadd.f32 %v716, %v763
          %v765 = vadd.f32 %v728, %v740
          %v766 = vadd.f32 %v765, %v752
          %v767 = vadd.f32 %v766, %v764
          %v768 = vsub.f32 0.0, %v767
          %s769 = scalar_lea.vmem [#allocation2], %s281
          %770 = vst [vmem:[%s769] sm:$0xff] %v768
        $region49: #{tpu_custom_call.1} parent=35 // loop_footer
          %s280 = sadd.s32 1, %s276
        $region50: #{tpu_custom_call.1} parent=35 // loop_footer_branch
          %275 = sbr.rel target = $region46
        $region51: #{tpu_custom_call.1} parent=35 // loop_exit
          _
        %p771 = scmp.eq.s32.totalorder %s29, 0
        // Predicated region
        $region52: #{tpu_custom_call.1} parent=35 // pred_check
          %p772 = pneg %p771
        $region53: #{tpu_custom_call.1} parent=35 // pred_check_branch
          %774 = sbr.rel (%p772) target = $region55
        $region54: #{tpu_custom_call.1} parent=35 // pred_region
          %v775 = vlaneseq
          %v776 = vand.u32 %v775, 127
          %vm777 = vcmp.lt.s32.totalorder %v776, 23
          %778 = vst [vmem:[#allocation5] sm:$0x1] -1e+30
          %779 = vst [vmem:[#allocation6] sm:$0x1] 0.0
          loop: start=0, step=1, limit=2
          $region56: #{tpu_custom_call.1} parent=54 // loop_pre_header
            _
          $region57: #{tpu_custom_call.1} parent=54 // loop_header
            %s781 = sphi 0, %s785
            %p782 = scmp.ge.s32.totalorder %s781, 2
          $region58: #{tpu_custom_call.1} parent=54 // loop_header_branch
            %784 = sbr.rel (%p782) target = $region62
          $region59: #{tpu_custom_call.1} parent=54 // loop_body
            %s786 = smul.u32 %s781, 8
            %s787 = scalar_lea.vmem [#allocation2], %s786
            %v788 = vld [vmem:[%s787] sm:$0xff]
            %v789 = vlaneseq
            %v790 = vshrl.u32 %v789, 7
            %v791 = vstv %s786
            %v792 = vadd.s32 %v791, %v790
            %vm793 = vcmp.lt.s32.totalorder %v792, 10
            %v794 = vsel %vm777, 1, 0
            %vm795 = vcmp.eq.s32.totalorder %v794, 1
            %v796 = vsel %vm795, %v788, -1e+30
            %797 = vmax.xlane.f32.xlu0 %v796
            %v798 = vpop.xlane.xlu0 %797
            %s799 = scalar_lea.vmem [#allocation3], %s786
            %vm800 = vcmask 7168
            %801 = vst.msk [vmem:[%s799] sm:$0xff] %vm800, %v798
            %v802 = vld [vmem:[#allocation5] sm:$0x1]
            %v803 = vsel %vm793, 1, 0
            %vm804 = vcmp.eq.s32.totalorder %v803, 1
            %v805 = vsel %vm804, %v788, -1e+30
            %v806 = vrot.slane %v805, 4
            %v807 = vmax.f32 %v805, %v806
            %v808 = vrot.slane %v807, 2
            %v809 = vmax.f32 %v807, %v808
            %v810 = vrot.slane %v809, 1
            %v811 = vmax.f32 %v809, %v810
            %v812 = vmax.f32 %v802, %v811
            %813 = vst [vmem:[#allocation5] sm:$0x1] %v812
          $region60: #{tpu_custom_call.1} parent=54 // loop_footer
            %s785 = sadd.s32 1, %s781
          $region61: #{tpu_custom_call.1} parent=54 // loop_footer_branch
            %780 = sbr.rel target = $region57
          $region62: #{tpu_custom_call.1} parent=54 // loop_exit
            _
          loop: start=0, step=1, limit=2
          $region63: #{tpu_custom_call.1} parent=54 // loop_pre_header
            _
          $region64: #{tpu_custom_call.1} parent=54 // loop_header
            %s815 = sphi 0, %s819
            %p816 = scmp.ge.s32.totalorder %s815, 2
          $region65: #{tpu_custom_call.1} parent=54 // loop_header_branch
            %818 = sbr.rel (%p816) target = $region69
          $region66: #{tpu_custom_call.1} parent=54 // loop_body
            %s820 = smul.u32 %s815, 8
            %s821 = scalar_lea.vmem [#allocation2], %s820
            %v822 = vld [vmem:[%s821] sm:$0xff]
            %v823 = vlaneseq
            %v824 = vshrl.u32 %v823, 7
            %v825 = vstv %s820
            %v826 = vadd.s32 %v825, %v824
            %vm827 = vcmp.lt.s32.totalorder %v826, 10
            %s828 = scalar_lea.vmem [#allocation3], %s820
            %v829 = vld [vmem:[%s828] sm:$0xff]
            %831 = vset.pattern.permute.xlu0 0
            %832 = vperm.xlu0 %831, %v829
            %v833 = vpop.permute.xlu0 %832
            %v835 = vsub.f32 %v822, %v833
            %v836 = vmul.f32 %v835, 1.442695
            %v837 = vpow.pop %v836
            %v838 = vsel %vm777, 1, 0
            %vm839 = vcmp.eq.s32.totalorder %v838, 1
            %v840 = vsel %vm839, %v837, 0.0
            %841 = vadd.xlane.f32.xlu0 %v840
            %v842 = vpop.xlane.xlu0 %841
            %s843 = scalar_lea.vmem [#allocation4], %s820
            %vm844 = vcmask 7168
            %845 = vst.msk [vmem:[%s843] sm:$0xff] %vm844, %v842
            %v846 = vld [vmem:[#allocation5] sm:$0x1]
            %v848 = vlaneseq
            %v849 = vshrl.u32 %v848, 7
            %v850 = vsub.s32 0, %v849
            %v851 = vrot.slane %v846, %v850
            %v853 = vsub.f32 %v822, %v851
            %v854 = vmul.f32 %v853, 1.442695
            %v855 = vpow.pop %v854
            %v856 = vsel %vm827, 1, 0
            %vm857 = vcmp.eq.s32.totalorder %v856, 1
            %v858 = vsel %vm857, %v855, 0.0
            %v859 = vld [vmem:[#allocation6] sm:$0x1]
            %v860 = vrot.slane %v858, 4
            %v861 = vadd.f32 %v858, %v860
            %v862 = vrot.slane %v861, 2
            %v863 = vadd.f32 %v861, %v862
            %v864 = vrot.slane %v863, 1
            %v865 = vadd.f32 %v863, %v864
            %v866 = vadd.f32 %v859, %v865
            %867 = vst [vmem:[#allocation6] sm:$0x1] %v866
          $region67: #{tpu_custom_call.1} parent=54 // loop_footer
            %s819 = sadd.s32 1, %s815
          $region68: #{tpu_custom_call.1} parent=54 // loop_footer_branch
            %814 = sbr.rel target = $region64
          $region69: #{tpu_custom_call.1} parent=54 // loop_exit
            _
          %v868 = vld [vmem:[#allocation4] sm:$0xff]
          %v869 = vld [vmem:[#allocation4 + $0x8] sm:$0xff]
          %v870 = vrcp.pop %v868
          %v871 = vmul.f32 1.0, %v870
          %v872 = vrcp.pop %v869
          %v873 = vmul.f32 1.0, %v872
          %vm874 = vcmask 7168
          %875 = vst.msk [vmem:[#allocation4] sm:$0xff] %vm874, %v871
          %876 = vst.msk [vmem:[#allocation4 + $0x8] sm:$0xff] %vm874, %v873
          %v877 = vld [vmem:[#allocation6] sm:$0x1]
          %v878 = vrcp.pop %v877
          %v879 = vmul.f32 1.0, %v878
          %880 = vst [vmem:[#allocation6] sm:$0x1] %v879
          loop: start=0, step=1, limit=2
          $region70: #{tpu_custom_call.1} parent=54 // loop_pre_header
            _
          $region71: #{tpu_custom_call.1} parent=54 // loop_header
            %s882 = sphi 0, %s886
            %p883 = scmp.ge.s32.totalorder %s882, 2
            %v887 = vphi 0.0, %v953
            %v888 = vphi 0.0, %v962
          $region72: #{tpu_custom_call.1} parent=54 // loop_header_branch
            %885 = sbr.rel (%p883) target = $region76
          $region73: #{tpu_custom_call.1} parent=54 // loop_body
            %s889 = smul.u32 %s882, 8
            %s890 = scalar_lea.vmem [#allocation2], %s889
            %v891 = vld [vmem:[%s890] sm:$0xff]
            %v892 = vlaneseq
            %v893 = vshrl.u32 %v892, 7
            %v894 = vstv %s889
            %v895 = vadd.s32 %v894, %v893
            %vm896 = vcmp.lt.s32.totalorder %v895, 10
            %s897 = scalar_lea.vmem [#allocation3], %s889
            %v898 = vld [vmem:[%s897] sm:$0xff]
            %900 = vset.pattern.permute.xlu0 0
            %901 = vperm.xlu0 %900, %v898
            %v902 = vpop.permute.xlu0 %901
            %v904 = vsub.f32 %v891, %v902
            %v905 = vmul.f32 %v904, 1.442695
            %v906 = vpow.pop %v905
            %v907 = vsel %vm777, 1, 0
            %vm908 = vcmp.eq.s32.totalorder %v907, 1
            %v909 = vsel %vm908, %v906, 0.0
            %s910 = scalar_lea.vmem [#allocation4], %s889
            %v911 = vld [vmem:[%s910] sm:$0xff]
            %913 = vset.pattern.permute.xlu0 0
            %914 = vperm.xlu0 %913, %v911
            %v915 = vpop.permute.xlu0 %914
            %v917 = vmul.f32 %v909, %v915
            %v918 = vld [vmem:[#allocation5] sm:$0x1]
            %v920 = vlaneseq
            %v921 = vshrl.u32 %v920, 7
            %v922 = vsub.s32 0, %v921
            %v923 = vrot.slane %v918, %v922
            %v925 = vsub.f32 %v891, %v923
            %v926 = vmul.f32 %v925, 1.442695
            %v927 = vpow.pop %v926
            %v928 = vsel %vm896, 1, 0
            %vm929 = vcmp.eq.s32.totalorder %v928, 1
            %v930 = vsel %vm929, %v927, 0.0
            %v931 = vld [vmem:[#allocation6] sm:$0x1]
            %v933 = vlaneseq
            %v934 = vshrl.u32 %v933, 7
            %v935 = vsub.s32 0, %v934
            %v936 = vrot.slane %v931, %v935
            %v938 = vmul.f32 %v930, %v936
            %v939 = vadd.f32 %v917, %v938
            %v940 = vmul.f32 %v917, %v938
            %v941 = vsub.f32 %v939, %v940
            %vm942 = vmand %vm929, %vm908
            %v943 = vsel %vm942, %v941, 0.0
            %v944 = vmul.f32 %v943, %v891
            %945 = vadd.xlane.f32.xlu0 %v944
            %v946 = vpop.xlane.xlu0 %945
            %v947 = vrot.slane %v946, 4
            %v948 = vadd.f32 %v946, %v947
            %v949 = vrot.slane %v948, 2
            %v950 = vadd.f32 %v948, %v949
            %v951 = vrot.slane %v950, 1
            %v952 = vadd.f32 %v950, %v951
            %v953 = vadd.f32 %v887, %v952
            %954 = vadd.xlane.f32.xlu0 %v943
            %v955 = vpop.xlane.xlu0 %954
            %v956 = vrot.slane %v955, 4
            %v957 = vadd.f32 %v955, %v956
            %v958 = vrot.slane %v957, 2
            %v959 = vadd.f32 %v957, %v958
            %v960 = vrot.slane %v959, 1
            %v961 = vadd.f32 %v959, %v960
            %v962 = vadd.f32 %v888, %v961
          $region74: #{tpu_custom_call.1} parent=54 // loop_footer
            %s886 = sadd.s32 1, %s882
          $region75: #{tpu_custom_call.1} parent=54 // loop_footer_branch
            %881 = sbr.rel target = $region71
          $region76: #{tpu_custom_call.1} parent=54 // loop_exit
            _
          %v963 = vrcp.pop %v888
          %v964 = vmul.f32 %v887, %v963
          %v965 = vld [vmem:[%s2] sm:$0x1]
          %v966 = vmul.f32 %v964, %v965
          %v967 = vld [vmem:[%s3] sm:$0x1]
          %v968 = vadd.f32 %v966, %v967
          %vm969 = vcmask 24576
          %970 = vst.msk [vmem:[%s273] sm:$0x1] %vm969, %v968
        $region55: #{tpu_custom_call.1} parent=35 // pred_fallthru
          _
        %s971 = sand.u32 %s142, 1
        %s972 = scalar_lea.sflag [#allocation9], %s971
        %s973 = sand.u32 %s142, 1
        %s974 = scalar_lea.vmem [#allocation12], %s973
        // Predicated region
        $region77: #{tpu_custom_call.1} parent=35 // pred_check
          %p975 = pneg %p152
        $region78: #{tpu_custom_call.1} parent=35 // pred_check_branch
          %977 = sbr.rel (%p975) target = $region80
        $region79: #{tpu_custom_call.1} parent=35 // pred_region
          %s979 = ssub.s32 16, 16
          %980 = vsyncadd %s972, %s979
          %s981 = smul.addr %s28, 16
          %s982 = scalar_lea.hbm %s4, %s981
          %s984 = sshll.u32 %s974, 4
          %s985 = int_to_ptr.vmem [resolvable:$true] %s984
          %987 = dma.vmem_to_hbm [thread:$0]  %s985, 16, %s982, %s972
        $region80: #{tpu_custom_call.1} parent=35 // pred_fallthru
          _
      $region36: #{tpu_custom_call.1} parent=5 // pred_fallthru
        _
      %p988 = scmp.le.s32.totalorder 2, %s19
      // Predicated region
      $region81: #{tpu_custom_call.1} parent=5 // pred_check
        %p989 = pneg %p988
      $region82: #{tpu_custom_call.1} parent=5 // pred_check_branch
        %991 = sbr.rel (%p989) target = $region84
      $region83: #{tpu_custom_call.1} parent=5 // pred_region
        %s992 = ssub.s32 %s19, 2
        // Predicated region
        $region85: #{tpu_custom_call.1} parent=83 // pred_check
          %p993 = pneg %p158
        $region86: #{tpu_custom_call.1} parent=83 // pred_check_branch
          %995 = sbr.rel (%p993) target = $region88
        $region87: #{tpu_custom_call.1} parent=83 // pred_region
          %s996 = sand.u32 %s143, 1
          %s997 = scalar_lea.sflag [#allocation9], %s996
          %s998 = sand.u32 %s143, 1
          %s999 = scalar_lea.vmem [#allocation12], %s998
          %1000 = dma.done %s997, 16
        $region88: #{tpu_custom_call.1} parent=83 // pred_fallthru
          _
      $region84: #{tpu_custom_call.1} parent=5 // pred_fallthru
        _
    $region6: #{tpu_custom_call.1} parent=1 // loop_footer
      %s23 = sadd.s32 1, %s19
    $region7: #{tpu_custom_call.1} parent=1 // loop_footer_branch
      %18 = sbr.rel target = $region3
    $region8: #{tpu_custom_call.1} parent=1 // loop_exit
      _
    %1001 = vsyncpa [#allocation8], 1
    %s1002 = scalar_lea.sflag [#allocation8], 1
    %1003 = vsyncpa %s1002, 1
    %1004 = vsyncpa [#allocation11], 1
    %s1005 = scalar_lea.sflag [#allocation11], 1
    %1006 = vsyncpa %s1005, 1
    %1007 = vsyncpa [#allocation9], 1
    %s1008 = scalar_lea.sflag [#allocation9], 1
    %1009 = vsyncpa %s1008, 1

</llo_original>
